<compile_context>
chip_gen: v6e
topology: v6e:2x2x1
jax: 0.10.0
libtpu: 0.0.40
codegen_flags: <defaults>
</compile_context>

<pallas_src>
import functools

import jax
import jax.numpy as jnp
import numpy as np
from jax.experimental import pallas as pl
from jax.experimental.pallas import tpu as pltpu


# ----------------------------------------------------------------------------
# Kernel: 3x3 conv (stride folded via phases) + BN affine [+ residual] [+ ReLU]
# ----------------------------------------------------------------------------
def _conv3x3_bn_kernel(*refs, stride, apply_relu, residual_mode):
    """refs layout:
       x_ref   : (1, s*s, Hps, Wps, Cin)   phase-split padded input (bf16)
       w_ref   : (3, 3, Cin, tc)           conv weights (bf16)
       scale_ref, shift_ref : (1, tc)      folded BN affine (f32)
       [residual_mode == "add" ] res_ref : (1, tr, wo, tc)
       [residual_mode == "proj"] xs_ref (1,tr,wo,Csc), wsc_ref (Csc,tc),
                                 ssc_ref (1,tc), bsc_ref (1,tc)
       o_ref   : (1, tr, wo, tc)
    """
    idx = 0
    x_ref = refs[idx]; idx += 1
    w_ref = refs[idx]; idx += 1
    scale_ref = refs[idx]; idx += 1
    shift_ref = refs[idx]; idx += 1
    res_ref = xs_ref = wsc_ref = ssc_ref = bsc_ref = None
    if residual_mode == "add":
        res_ref = refs[idx]; idx += 1
    elif residual_mode == "proj":
        xs_ref, wsc_ref, ssc_ref, bsc_ref = refs[idx:idx + 4]; idx += 4
    o_ref = refs[idx]

    s = stride
    cin = x_ref.shape[-1]
    _, tr, wo, tc = o_ref.shape
    r0 = pl.program_id(1) * tr            # first output row of this row tile

    acc = jnp.zeros((tr * wo, tc), jnp.float32)
    for kh in range(3):
        for kw in range(3):
            ph = (kh % s) * s + (kw % s)                  # phase plane index
            patch = x_ref[0, ph, pl.ds(r0 + kh // s, tr), pl.ds(kw // s, wo), :]
            patch = patch.reshape(tr * wo, cin).astype(jnp.bfloat16)
            wtap = w_ref[kh, kw].astype(jnp.bfloat16)     # (Cin, tc) per tap
            acc = acc + jnp.dot(patch, wtap, preferred_element_type=jnp.float32)

    out = acc * scale_ref[...] + shift_ref[...]           # BN affine (f32)

    if residual_mode == "add":
        out = out + res_ref[...].reshape(tr * wo, tc).astype(jnp.float32)
    elif residual_mode == "proj":
        csc = xs_ref.shape[-1]
        xs = xs_ref[...].reshape(tr * wo, csc).astype(jnp.bfloat16)
        shortcut = jnp.dot(xs, wsc_ref[...].astype(jnp.bfloat16),
                           preferred_element_type=jnp.float32)
        out = out + shortcut * ssc_ref[...] + bsc_ref[...]

    if apply_relu:
        out = jnp.maximum(out, 0.0)
    o_ref[...] = out.reshape(1, tr, wo, tc).astype(o_ref.dtype)


# ----------------------------------------------------------------------------
# Wrapper
# ----------------------------------------------------------------------------
def _pick_tile(n, candidates):
    for c in candidates:
        if n % c == 0:
            return c
    return n


def conv3x3_bn_act(x, w_hwio, scale, shift, *, stride=1, relu=True,
                   residual=None, proj=None):
    """3x3 conv (padding=1, given stride) + BN affine [+ residual | + fused
    1x1-projection shortcut (+ its BN)] [+ ReLU].  x is NHWC float32."""
    assert residual is None or proj is None
    n, h, w, cin = x.shape
    cout = w_hwio.shape[-1]
    s = stride
    ho = (h - 1) // s + 1
    wo = (w - 1) // s + 1

    # Pad (1,1) for the conv, round padded extent up to a multiple of s, and
    # space-to-depth into s*s phase planes.  For s == 1 this degenerates to
    # just the padded input.  Cast to bf16 (halves activation DMA bytes).
    hp = ((h + 2 + s - 1) // s) * s
    wp = ((w + 2 + s - 1) // s) * s
    hps, wps = hp // s, wp // s
    xpad = jnp.pad(x, ((0, 0), (1, hp - h - 1), (1, wp - w - 1), (0, 0)))
    xph = (xpad.reshape(n, hps, s, wps, s, cin)
               .transpose(0, 2, 4, 1, 3, 5)
               .reshape(n, s * s, hps, wps, cin)
               .astype(jnp.bfloat16))
    w_bf16 = w_hwio.astype(jnp.bfloat16)

    # Tiling: row tiles + Cout tiles (lane-dense 256/128 for real ResNet
    # channel counts; falls back to full extent for tiny toy channels).
    tr = _pick_tile(ho, (32, 16, 8))
    tc = _pick_tile(cout, (256, 128))
    grid = (n, ho // tr, cout // tc)

    in_specs = [
        pl.BlockSpec((1, s * s, hps, wps, cin), lambda i, r, c: (i, 0, 0, 0, 0)),
        pl.BlockSpec((3, 3, cin, tc),           lambda i, r, c: (0, 0, 0, c)),
        pl.BlockSpec((1, tc),                   lambda i, r, c: (0, c)),
        pl.BlockSpec((1, tc),                   lambda i, r, c: (0, c)),
    ]
    args = [xph, w_bf16, scale.reshape(1, -1), shift.reshape(1, -1)]

    residual_mode = None
    if residual is not None:
        residual_mode = "add"
        in_specs.append(pl.BlockSpec((1, tr, wo, tc), lambda i, r, c: (i, r, 0, c)))
        args.append(residual)
    elif proj is not None:
        residual_mode = "proj"
        x_sub, wsc, ssc, bsc = proj
        csc = x_sub.shape[-1]
        in_specs += [
            pl.BlockSpec((1, tr, wo, csc), lambda i, r, c: (i, r, 0, 0)),
            pl.BlockSpec((csc, tc),        lambda i, r, c: (0, c)),
            pl.BlockSpec((1, tc),          lambda i, r, c: (0, c)),
            pl.BlockSpec((1, tc),          lambda i, r, c: (0, c)),
        ]
        args += [x_sub.astype(jnp.bfloat16), wsc.astype(jnp.bfloat16),
                 ssc.reshape(1, -1), bsc.reshape(1, -1)]

    kernel = functools.partial(_conv3x3_bn_kernel, stride=s, apply_relu=relu,
                               residual_mode=residual_mode)
    return pl.pallas_call(
        kernel,
        out_shape=jax.ShapeDtypeStruct((n, ho, wo, cout), x.dtype),
        grid=grid,
        in_specs=in_specs,
        out_specs=pl.BlockSpec((1, tr, wo, tc), lambda i, r, c: (i, r, 0, c)),
        compiler_params=pltpu.CompilerParams(
            dimension_semantics=("parallel", "parallel", "parallel")),
    )(*args)


# ----------------------------------------------------------------------------
# BasicBlock forward (NCHW in / NCHW out, matching the PyTorch module)
# ----------------------------------------------------------------------------
def basic_block_forward(x_nchw, params, in_planes, planes, stride):
    x = jnp.transpose(x_nchw, (0, 2, 3, 1))                 # -> NHWC (f32)

    # conv1 (stride folded in) + bn1 + relu — one fused kernel.
    out1 = conv3x3_bn_act(x, params["w1"], params["s1"], params["b1"],
                          stride=stride, relu=True)

    has_proj = (stride != 1) or (in_planes != planes)
    if has_proj:
        # Projection shortcut fused into the conv2 kernel (extra 1x1 matmul).
        x_sub = x[:, ::stride, ::stride, :]
        out = conv3x3_bn_act(out1, params["w2"], params["s2"], params["b2"],
                             stride=1, relu=True,
                             proj=(x_sub, params["wsc"],
                                   params["ssc"], params["bsc"]))
    else:
        assert in_planes == planes            # PyTorch identity-shortcut contract
        out = conv3x3_bn_act(out1, params["w2"], params["s2"], params["b2"],
                             stride=1, relu=True, residual=x)
    return jnp.transpose(out, (0, 3, 1, 2))                 # -> NCHW


# ----------------------------------------------------------------------------
# Deterministic parameter init + pure-JAX reference
# ----------------------------------------------------------------------------
def _bn_affine(keys, c):
    kg, kb, km, kv = keys
    gamma = jax.random.uniform(kg, (c,), jnp.float32, 0.5, 1.5)
    beta = 0.1 * jax.random.normal(kb, (c,), jnp.float32)
    mean = 0.1 * jax.random.normal(km, (c,), jnp.float32)
    var = jax.random.uniform(kv, (c,), jnp.float32, 0.5, 1.5)
    eps = 1e-5
    scale = gamma / jnp.sqrt(var + eps)
    shift = beta - mean * scale
    return scale, shift


def init_params(key, in_planes, planes):
    keys = jax.random.split(key, 15)
    p = {}
    p["w1"] = 0.1 * jax.random.normal(keys[0], (3, 3, in_planes, planes), jnp.float32)
    p["s1"], p["b1"] = _bn_affine(keys[1:5], planes)
    p["w2"] = 0.1 * jax.random.normal(keys[5], (3, 3, planes, planes), jnp.float32)
    p["s2"], p["b2"] = _bn_affine(keys[6:10], planes)
    p["wsc"] = 0.1 * jax.random.normal(keys[10], (in_planes, planes), jnp.float32)
    p["ssc"], p["bsc"] = _bn_affine(keys[11:15], planes)
    return p


def basic_block_reference(x_nchw, params, in_planes, planes, stride):
    x = jnp.transpose(x_nchw, (0, 2, 3, 1))

    def conv(inp, w, s, pad):
        return jax.lax.conv_general_dilated(
            inp, w, (s, s), ((pad, pad), (pad, pad)),
            dimension_numbers=("NHWC", "HWIO", "NHWC"))

    o = conv(x, params["w1"], stride, 1) * params["s1"] + params["b1"]
    o = jnp.maximum(o, 0.0)
    o = conv(o, params["w2"], 1, 1) * params["s2"] + params["b2"]
    if (stride != 1) or (in_planes != planes):
        sc = conv(x, params["wsc"][None, None], stride, 0) * params["ssc"] + params["bsc"]
    else:
        sc = x
    o = jnp.maximum(o + sc, 0.0)
    return jnp.transpose(o, (0, 3, 1, 2))


# ----------------------------------------------------------------------------
if __name__ == "__main__":
    key = jax.random.PRNGKey(0)
    N, H, W = 2, 16, 16
    # (in_planes, planes, stride): projection-shortcut block and identity block.
    for (in_planes, planes, stride) in [(4, 8, 2), (8, 8, 1)]:
        key, kx, kp = jax.random.split(key, 3)
        x = jax.random.normal(kx, (N, in_planes, H, W), jnp.float32)  # NCHW
        params = init_params(kp, in_planes, planes)

        out = jax.block_until_ready(
            basic_block_forward(x, params, in_planes, planes, stride))
        ref = jax.block_until_ready(
            basic_block_reference(x, params, in_planes, planes, stride))

        ho = (H - 1) // stride + 1
        assert out.shape == (N, planes, ho, ho), out.shape
        # bf16 MXU operands (f32 accumulation) -> slightly relaxed tolerance.
        np.testing.assert_allclose(np.asarray(out), np.asarray(ref),
                                   rtol=2e-2, atol=2e-2)
    print("KERNEL_OK")
</pallas_src>

<mosaic_0001>
module attributes {stable_mosaic.version = 11 : i64} {
  func.func @_conv3x3_bn_kernel(%arg0: i32, %arg1: i32, %arg2: i32, %arg3: memref<1x4x9x9x4xbf16, #tpu.memory_space<vmem>>, %arg4: memref<3x3x4x8xbf16, #tpu.memory_space<vmem>>, %arg5: memref<1x8xf32, #tpu.memory_space<vmem>>, %arg6: memref<1x8xf32, #tpu.memory_space<vmem>>, %arg7: memref<1x8x8x8xf32, #tpu.memory_space<vmem>>) attributes {dimension_semantics = [#tpu.dimension_semantics<parallel>, #tpu.dimension_semantics<parallel>, #tpu.dimension_semantics<parallel>], iteration_bounds = array<i64: 2, 1, 1>, scalar_prefetch = 0 : i64, scratch_operands = 0 : i64, tpu.core_type = #tpu.core_type<tc>, window_params = [{transform_indices = @transform_0, window_bounds = array<i64: 1, 4, 9, 9, 4>}, {transform_indices = @transform_1, window_bounds = array<i64: 3, 3, 4, 8>}, {transform_indices = @transform_2, window_bounds = array<i64: 1, 8>}, {transform_indices = @transform_3, window_bounds = array<i64: 1, 8>}, {transform_indices = @transform_4, window_bounds = array<i64: 1, 8, 8, 8>}]} {
    %c8_i32 = arith.constant 8 : i32
    %0 = arith.muli %arg1, %c8_i32 : i32
    %cst = arith.constant 0.000000e+00 : f32
    %1 = vector.broadcast %cst : f32 to vector<64x8xf32>
    %c0_i32 = arith.constant 0 : i32
    %2 = arith.addi %0, %c0_i32 : i32
    %c0 = arith.constant 0 : index
    %c0_0 = arith.constant 0 : index
    %3 = arith.index_cast %2 : i32 to index
    %c0_1 = arith.constant 0 : index
    %c0_2 = arith.constant 0 : index
    %4 = vector.load %arg3[%c0, %c0_0, %3, %c0_1, %c0_2] : memref<1x4x9x9x4xbf16, #tpu.memory_space<vmem>>, vector<1x1x8x8x4xbf16>
    %5 = vector.shape_cast %4 : vector<1x1x8x8x4xbf16> to vector<8x8x4xbf16>
    %6 = vector.shape_cast %5 : vector<8x8x4xbf16> to vector<64x4xbf16>
    %c0_3 = arith.constant 0 : index
    %c0_4 = arith.constant 0 : index
    %c0_5 = arith.constant 0 : index
    %c0_6 = arith.constant 0 : index
    %7 = vector.load %arg4[%c0_3, %c0_4, %c0_5, %c0_6] : memref<3x3x4x8xbf16, #tpu.memory_space<vmem>>, vector<1x1x4x8xbf16>
    %8 = vector.shape_cast %7 : vector<1x1x4x8xbf16> to vector<4x8xbf16>
    %cst_7 = arith.constant dense<0.000000e+00> : vector<64x8xf32>
    %9 = tpu.matmul %6, %8, %cst_7 {dimension_numbers = #tpu.dot_dimension_numbers<[1], [0], [0], [1], [0, 0, 1, 1], [], []>} : vector<64x4xbf16>, vector<4x8xbf16>, vector<64x8xf32> -> vector<64x8xf32>
    %10 = arith.addf %1, %9 : vector<64x8xf32>
    %c0_i32_8 = arith.constant 0 : i32
    %11 = arith.addi %0, %c0_i32_8 : i32
    %c0_9 = arith.constant 0 : index
    %c1 = arith.constant 1 : index
    %12 = arith.index_cast %11 : i32 to index
    %c0_10 = arith.constant 0 : index
    %c0_11 = arith.constant 0 : index
    %13 = vector.load %arg3[%c0_9, %c1, %12, %c0_10, %c0_11] : memref<1x4x9x9x4xbf16, #tpu.memory_space<vmem>>, vector<1x1x8x8x4xbf16>
    %14 = vector.shape_cast %13 : vector<1x1x8x8x4xbf16> to vector<8x8x4xbf16>
    %15 = vector.shape_cast %14 : vector<8x8x4xbf16> to vector<64x4xbf16>
    %c0_12 = arith.constant 0 : index
    %c1_13 = arith.constant 1 : index
    %c0_14 = arith.constant 0 : index
    %c0_15 = arith.constant 0 : index
    %16 = vector.load %arg4[%c0_12, %c1_13, %c0_14, %c0_15] : memref<3x3x4x8xbf16, #tpu.memory_space<vmem>>, vector<1x1x4x8xbf16>
    %17 = vector.shape_cast %16 : vector<1x1x4x8xbf16> to vector<4x8xbf16>
    %cst_16 = arith.constant dense<0.000000e+00> : vector<64x8xf32>
    %18 = tpu.matmul %15, %17, %cst_16 {dimension_numbers = #tpu.dot_dimension_numbers<[1], [0], [0], [1], [0, 0, 1, 1], [], []>} : vector<64x4xbf16>, vector<4x8xbf16>, vector<64x8xf32> -> vector<64x8xf32>
    %19 = arith.addf %10, %18 : vector<64x8xf32>
    %c0_i32_17 = arith.constant 0 : i32
    %20 = arith.addi %0, %c0_i32_17 : i32
    %c0_18 = arith.constant 0 : index
    %c0_19 = arith.constant 0 : index
    %21 = arith.index_cast %20 : i32 to index
    %c1_20 = arith.constant 1 : index
    %c0_21 = arith.constant 0 : index
    %22 = vector.load %arg3[%c0_18, %c0_19, %21, %c1_20, %c0_21] : memref<1x4x9x9x4xbf16, #tpu.memory_space<vmem>>, vector<1x1x8x8x4xbf16>
    %23 = vector.shape_cast %22 : vector<1x1x8x8x4xbf16> to vector<8x8x4xbf16>
    %24 = vector.shape_cast %23 : vector<8x8x4xbf16> to vector<64x4xbf16>
    %c0_22 = arith.constant 0 : index
    %c2 = arith.constant 2 : index
    %c0_23 = arith.constant 0 : index
    %c0_24 = arith.constant 0 : index
    %25 = vector.load %arg4[%c0_22, %c2, %c0_23, %c0_24] : memref<3x3x4x8xbf16, #tpu.memory_space<vmem>>, vector<1x1x4x8xbf16>
    %26 = vector.shape_cast %25 : vector<1x1x4x8xbf16> to vector<4x8xbf16>
    %cst_25 = arith.constant dense<0.000000e+00> : vector<64x8xf32>
    %27 = tpu.matmul %24, %26, %cst_25 {dimension_numbers = #tpu.dot_dimension_numbers<[1], [0], [0], [1], [0, 0, 1, 1], [], []>} : vector<64x4xbf16>, vector<4x8xbf16>, vector<64x8xf32> -> vector<64x8xf32>
    %28 = arith.addf %19, %27 : vector<64x8xf32>
    %c0_i32_26 = arith.constant 0 : i32
    %29 = arith.addi %0, %c0_i32_26 : i32
    %c0_27 = arith.constant 0 : index
    %c2_28 = arith.constant 2 : index
    %30 = arith.index_cast %29 : i32 to index
    %c0_29 = arith.constant 0 : index
    %c0_30 = arith.constant 0 : index
    %31 = vector.load %arg3[%c0_27, %c2_28, %30, %c0_29, %c0_30] : memref<1x4x9x9x4xbf16, #tpu.memory_space<vmem>>, vector<1x1x8x8x4xbf16>
    %32 = vector.shape_cast %31 : vector<1x1x8x8x4xbf16> to vector<8x8x4xbf16>
    %33 = vector.shape_cast %32 : vector<8x8x4xbf16> to vector<64x4xbf16>
    %c1_31 = arith.constant 1 : index
    %c0_32 = arith.constant 0 : index
    %c0_33 = arith.constant 0 : index
    %c0_34 = arith.constant 0 : index
    %34 = vector.load %arg4[%c1_31, %c0_32, %c0_33, %c0_34] : memref<3x3x4x8xbf16, #tpu.memory_space<vmem>>, vector<1x1x4x8xbf16>
    %35 = vector.shape_cast %34 : vector<1x1x4x8xbf16> to vector<4x8xbf16>
    %cst_35 = arith.constant dense<0.000000e+00> : vector<64x8xf32>
    %36 = tpu.matmul %33, %35, %cst_35 {dimension_numbers = #tpu.dot_dimension_numbers<[1], [0], [0], [1], [0, 0, 1, 1], [], []>} : vector<64x4xbf16>, vector<4x8xbf16>, vector<64x8xf32> -> vector<64x8xf32>
    %37 = arith.addf %28, %36 : vector<64x8xf32>
    %c0_i32_36 = arith.constant 0 : i32
    %38 = arith.addi %0, %c0_i32_36 : i32
    %c0_37 = arith.constant 0 : index
    %c3 = arith.constant 3 : index
    %39 = arith.index_cast %38 : i32 to index
    %c0_38 = arith.constant 0 : index
    %c0_39 = arith.constant 0 : index
    %40 = vector.load %arg3[%c0_37, %c3, %39, %c0_38, %c0_39] : memref<1x4x9x9x4xbf16, #tpu.memory_space<vmem>>, vector<1x1x8x8x4xbf16>
    %41 = vector.shape_cast %40 : vector<1x1x8x8x4xbf16> to vector<8x8x4xbf16>
    %42 = vector.shape_cast %41 : vector<8x8x4xbf16> to vector<64x4xbf16>
    %c1_40 = arith.constant 1 : index
    %c1_41 = arith.constant 1 : index
    %c0_42 = arith.constant 0 : index
    %c0_43 = arith.constant 0 : index
    %43 = vector.load %arg4[%c1_40, %c1_41, %c0_42, %c0_43] : memref<3x3x4x8xbf16, #tpu.memory_space<vmem>>, vector<1x1x4x8xbf16>
    %44 = vector.shape_cast %43 : vector<1x1x4x8xbf16> to vector<4x8xbf16>
    %cst_44 = arith.constant dense<0.000000e+00> : vector<64x8xf32>
    %45 = tpu.matmul %42, %44, %cst_44 {dimension_numbers = #tpu.dot_dimension_numbers<[1], [0], [0], [1], [0, 0, 1, 1], [], []>} : vector<64x4xbf16>, vector<4x8xbf16>, vector<64x8xf32> -> vector<64x8xf32>
    %46 = arith.addf %37, %45 : vector<64x8xf32>
    %c0_i32_45 = arith.constant 0 : i32
    %47 = arith.addi %0, %c0_i32_45 : i32
    %c0_46 = arith.constant 0 : index
    %c2_47 = arith.constant 2 : index
    %48 = arith.index_cast %47 : i32 to index
    %c1_48 = arith.constant 1 : index
    %c0_49 = arith.constant 0 : index
    %49 = vector.load %arg3[%c0_46, %c2_47, %48, %c1_48, %c0_49] : memref<1x4x9x9x4xbf16, #tpu.memory_space<vmem>>, vector<1x1x8x8x4xbf16>
    %50 = vector.shape_cast %49 : vector<1x1x8x8x4xbf16> to vector<8x8x4xbf16>
    %51 = vector.shape_cast %50 : vector<8x8x4xbf16> to vector<64x4xbf16>
    %c1_50 = arith.constant 1 : index
    %c2_51 = arith.constant 2 : index
    %c0_52 = arith.constant 0 : index
    %c0_53 = arith.constant 0 : index
    %52 = vector.load %arg4[%c1_50, %c2_51, %c0_52, %c0_53] : memref<3x3x4x8xbf16, #tpu.memory_space<vmem>>, vector<1x1x4x8xbf16>
    %53 = vector.shape_cast %52 : vector<1x1x4x8xbf16> to vector<4x8xbf16>
    %cst_54 = arith.constant dense<0.000000e+00> : vector<64x8xf32>
    %54 = tpu.matmul %51, %53, %cst_54 {dimension_numbers = #tpu.dot_dimension_numbers<[1], [0], [0], [1], [0, 0, 1, 1], [], []>} : vector<64x4xbf16>, vector<4x8xbf16>, vector<64x8xf32> -> vector<64x8xf32>
    %55 = arith.addf %46, %54 : vector<64x8xf32>
    %c1_i32 = arith.constant 1 : i32
    %56 = arith.addi %0, %c1_i32 : i32
    %c0_55 = arith.constant 0 : index
    %c0_56 = arith.constant 0 : index
    %57 = arith.index_cast %56 : i32 to index
    %c0_57 = arith.constant 0 : index
    %c0_58 = arith.constant 0 : index
    %58 = vector.load %arg3[%c0_55, %c0_56, %57, %c0_57, %c0_58] : memref<1x4x9x9x4xbf16, #tpu.memory_space<vmem>>, vector<1x1x8x8x4xbf16>
    %59 = vector.shape_cast %58 : vector<1x1x8x8x4xbf16> to vector<8x8x4xbf16>
    %60 = vector.shape_cast %59 : vector<8x8x4xbf16> to vector<64x4xbf16>
    %c2_59 = arith.constant 2 : index
    %c0_60 = arith.constant 0 : index
    %c0_61 = arith.constant 0 : index
    %c0_62 = arith.constant 0 : index
    %61 = vector.load %arg4[%c2_59, %c0_60, %c0_61, %c0_62] : memref<3x3x4x8xbf16, #tpu.memory_space<vmem>>, vector<1x1x4x8xbf16>
    %62 = vector.shape_cast %61 : vector<1x1x4x8xbf16> to vector<4x8xbf16>
    %cst_63 = arith.constant dense<0.000000e+00> : vector<64x8xf32>
    %63 = tpu.matmul %60, %62, %cst_63 {dimension_numbers = #tpu.dot_dimension_numbers<[1], [0], [0], [1], [0, 0, 1, 1], [], []>} : vector<64x4xbf16>, vector<4x8xbf16>, vector<64x8xf32> -> vector<64x8xf32>
    %64 = arith.addf %55, %63 : vector<64x8xf32>
    %c1_i32_64 = arith.constant 1 : i32
    %65 = arith.addi %0, %c1_i32_64 : i32
    %c0_65 = arith.constant 0 : index
    %c1_66 = arith.constant 1 : index
    %66 = arith.index_cast %65 : i32 to index
    %c0_67 = arith.constant 0 : index
    %c0_68 = arith.constant 0 : index
    %67 = vector.load %arg3[%c0_65, %c1_66, %66, %c0_67, %c0_68] : memref<1x4x9x9x4xbf16, #tpu.memory_space<vmem>>, vector<1x1x8x8x4xbf16>
    %68 = vector.shape_cast %67 : vector<1x1x8x8x4xbf16> to vector<8x8x4xbf16>
    %69 = vector.shape_cast %68 : vector<8x8x4xbf16> to vector<64x4xbf16>
    %c2_69 = arith.constant 2 : index
    %c1_70 = arith.constant 1 : index
    %c0_71 = arith.constant 0 : index
    %c0_72 = arith.constant 0 : index
    %70 = vector.load %arg4[%c2_69, %c1_70, %c0_71, %c0_72] : memref<3x3x4x8xbf16, #tpu.memory_space<vmem>>, vector<1x1x4x8xbf16>
    %71 = vector.shape_cast %70 : vector<1x1x4x8xbf16> to vector<4x8xbf16>
    %cst_73 = arith.constant dense<0.000000e+00> : vector<64x8xf32>
    %72 = tpu.matmul %69, %71, %cst_73 {dimension_numbers = #tpu.dot_dimension_numbers<[1], [0], [0], [1], [0, 0, 1, 1], [], []>} : vector<64x4xbf16>, vector<4x8xbf16>, vector<64x8xf32> -> vector<64x8xf32>
    %73 = arith.addf %64, %72 : vector<64x8xf32>
    %c1_i32_74 = arith.constant 1 : i32
    %74 = arith.addi %0, %c1_i32_74 : i32
    %c0_75 = arith.constant 0 : index
    %c0_76 = arith.constant 0 : index
    %75 = arith.index_cast %74 : i32 to index
    %c1_77 = arith.constant 1 : index
    %c0_78 = arith.constant 0 : index
    %76 = vector.load %arg3[%c0_75, %c0_76, %75, %c1_77, %c0_78] : memref<1x4x9x9x4xbf16, #tpu.memory_space<vmem>>, vector<1x1x8x8x4xbf16>
    %77 = vector.shape_cast %76 : vector<1x1x8x8x4xbf16> to vector<8x8x4xbf16>
    %78 = vector.shape_cast %77 : vector<8x8x4xbf16> to vector<64x4xbf16>
    %c2_79 = arith.constant 2 : index
    %c2_80 = arith.constant 2 : index
    %c0_81 = arith.constant 0 : index
    %c0_82 = arith.constant 0 : index
    %79 = vector.load %arg4[%c2_79, %c2_80, %c0_81, %c0_82] : memref<3x3x4x8xbf16, #tpu.memory_space<vmem>>, vector<1x1x4x8xbf16>
    %80 = vector.shape_cast %79 : vector<1x1x4x8xbf16> to vector<4x8xbf16>
    %cst_83 = arith.constant dense<0.000000e+00> : vector<64x8xf32>
    %81 = tpu.matmul %78, %80, %cst_83 {dimension_numbers = #tpu.dot_dimension_numbers<[1], [0], [0], [1], [0, 0, 1, 1], [], []>} : vector<64x4xbf16>, vector<4x8xbf16>, vector<64x8xf32> -> vector<64x8xf32>
    %82 = arith.addf %73, %81 : vector<64x8xf32>
    %c0_84 = arith.constant 0 : index
    %c0_85 = arith.constant 0 : index
    %83 = vector.load %arg5[%c0_84, %c0_85] : memref<1x8xf32, #tpu.memory_space<vmem>>, vector<1x8xf32>
    %84 = vector.broadcast %83 : vector<1x8xf32> to vector<64x8xf32>
    %85 = arith.mulf %82, %84 : vector<64x8xf32>
    %c0_86 = arith.constant 0 : index
    %c0_87 = arith.constant 0 : index
    %86 = vector.load %arg6[%c0_86, %c0_87] : memref<1x8xf32, #tpu.memory_space<vmem>>, vector<1x8xf32>
    %87 = vector.broadcast %86 : vector<1x8xf32> to vector<64x8xf32>
    %88 = arith.addf %85, %87 : vector<64x8xf32>
    %cst_88 = arith.constant 0.000000e+00 : f32
    %89 = vector.broadcast %cst_88 : f32 to vector<64x8xf32>
    %90 = arith.maximumf %88, %89 : vector<64x8xf32>
    %91 = vector.shape_cast %90 : vector<64x8xf32> to vector<1x8x8x8xf32>
    %c0_89 = arith.constant 0 : index
    %c0_90 = arith.constant 0 : index
    %c0_91 = arith.constant 0 : index
    %c0_92 = arith.constant 0 : index
    %92 = vector.load %arg7[%c0_89, %c0_90, %c0_91, %c0_92] : memref<1x8x8x8xf32, #tpu.memory_space<vmem>>, vector<1x8x8x8xf32>
    tpu.vector_store %arg7[%c0_89, %c0_90, %c0_91, %c0_92], %91 {strides = array<i32>} : memref<1x8x8x8xf32, #tpu.memory_space<vmem>>, vector<1x8x8x8xf32>,
    return
  }
  func.func @transform_0(%arg0: i32, %arg1: i32, %arg2: i32) -> (i32, i32, i32, i32, i32) {
    %c0_i32 = arith.constant 0 : i32
    %c0_i32_0 = arith.constant 0 : i32
    %c0_i32_1 = arith.constant 0 : i32
    %c0_i32_2 = arith.constant 0 : i32
    %c0_i32_3 = arith.constant 0 : i32
    return %arg0, %c0_i32, %c0_i32_0, %c0_i32_1, %c0_i32_2 : i32, i32, i32, i32, i32
  }
  func.func @transform_1(%arg0: i32, %arg1: i32, %arg2: i32) -> (i32, i32, i32, i32) {
    %c0_i32 = arith.constant 0 : i32
    %c0_i32_0 = arith.constant 0 : i32
    %c0_i32_1 = arith.constant 0 : i32
    %c0_i32_2 = arith.constant 0 : i32
    return %c0_i32, %c0_i32_0, %c0_i32_1, %arg2 : i32, i32, i32, i32
  }
  func.func @transform_2(%arg0: i32, %arg1: i32, %arg2: i32) -> (i32, i32) {
    %c0_i32 = arith.constant 0 : i32
    %c0_i32_0 = arith.constant 0 : i32
    return %c0_i32, %arg2 : i32, i32
  }
  func.func @transform_3(%arg0: i32, %arg1: i32, %arg2: i32) -> (i32, i32) {
    %c0_i32 = arith.constant 0 : i32
    %c0_i32_0 = arith.constant 0 : i32
    return %c0_i32, %arg2 : i32, i32
  }
  func.func @transform_4(%arg0: i32, %arg1: i32, %arg2: i32) -> (i32, i32, i32, i32) {
    %c0_i32 = arith.constant 0 : i32
    %c0_i32_0 = arith.constant 0 : i32
    return %arg0, %arg1, %c0_i32, %arg2 : i32, i32, i32, i32
  }
}

</mosaic_0001>

<llo_original>
// kernel: tpu_custom_call.1
$region0: #{tpu_custom_call.1}
  #allocation0 [shape = 'u32[]', space=smem, size = 0x4, offset = 0x4, fixed_abs, tag = 'smem constant byte address 0x4 - core index']
  #allocation1 [shape = 'u32[144,128]{1,0:T(1,128)}', space=vmem, size = 0x12000, scoped, tag = 'internal scratch']
  %s0 = inlined_call_operand.vmem [shape: bf16[2,4,9,9,4], index: 0, kind: input, shape index: {}]
  %s1 = inlined_call_operand.vmem [shape: bf16[3,3,4,8], index: 1, kind: input, shape index: {}]
  %s2 = inlined_call_operand.vmem [shape: f32[1,8], index: 2, kind: input, shape index: {}]
  %s3 = inlined_call_operand.vmem [shape: f32[1,8], index: 3, kind: input, shape index: {}]
  %s4 = inlined_call_operand.hbm [shape: f32[2,8,8,8], index: 4, kind: output, shape index: {}]
  %s5 = sld [smem:[#allocation0]]
  $region49: #{tpu_custom_call.1} parent=0
    _
  %s7 = ssub.s32 1, %s5
  %s8 = scalar_select 0, %s7, %s5
  $region1: #{tpu_custom_call.1} parent=0
    #allocation2 [shape = 'u8[65536]{0}', space=vmem, size = 0x10000, scoped, tag = 'output window, operand 0']
    #allocation3 [shape = 's32[2]{0}', space=sflag, size = 0x8, scoped, tag = 'scoped memory for tpu_custom_call.1']
    %9 = vsyncpa [#allocation3], 0
    %s10 = scalar_lea.sflag [#allocation3], 1
    %11 = vsyncpa %s10, 0
    loop: start=0, step=1, limit=4
    $region2: #{tpu_custom_call.1} parent=1 // loop_pre_header
      _
    $region3: #{tpu_custom_call.1} parent=1 // loop_header
      %s13 = sphi 0, %s17
      %p14 = scmp.ge.s32.totalorder %s13, 4
      %s20 = sphi 0, %s39
      %s21 = sphi 0, %s35
      %s22 = sphi 0, %s31
      %s23 = sphi 0, %s20
      %s24 = sphi 0, %s21
      %s25 = sphi 0, %s22
      %s26 = sphi 0, %s23
      %s27 = sphi 0, %s24
      %s28 = sphi 0, %s25
      %s42 = sphi 0, %s44
      %s45 = sphi 0, %s42
      %s46 = sphi 0, %s45
      %s62 = sphi 0, %s46
      %s68 = sphi 0, %s70
      %s71 = sphi 0, %s68
      %s72 = sphi 0, %s71
      %s88 = sphi 0, %s72
      %s94 = sphi 0, %s96
      %s97 = sphi 0, %s94
      %s98 = sphi 0, %s97
      %s114 = sphi 0, %s98
      %s120 = sphi 0, %s122
      %s123 = sphi 0, %s120
      %s124 = sphi 0, %s123
      %s140 = sphi 0, %s124
      %s150 = sphi 0, %s152
      %s153 = sphi 0, %s150
      %s154 = sphi 0, %s153
      %s170 = sphi 0, %s154
    $region4: #{tpu_custom_call.1} parent=1 // loop_header_branch
      %16 = sbr.rel (%p14) target = $region8
    $region5: #{tpu_custom_call.1} parent=1 // loop_body
      %s18 = ssub.s32 %s13, 1
      %s19 = ssub.s32 %s13, 2
      %s29 = sadd.s32 1, %s22
      %p30 = scmp.ge.s32.totalorder %s29, 1
      %s31 = scalar_select %p30, 0, %s29
      %s32 = sadd.s32 1, %s21
      %s33 = scalar_select %p30, %s32, %s21
      %p34 = scmp.ge.s32.totalorder %s33, 1
      %s35 = scalar_select %p34, 0, %s33
      %s36 = sadd.s32 1, %s20
      %s37 = scalar_select %p34, %s36, %s20
      %p38 = scmp.ge.s32.totalorder %s37, 2
      %s39 = scalar_select %p38, 0, %s37
      %s40 = ssub.s32 %s20, %s39
      %p41 = scmp.eq.s32.totalorder %s40, 0
      %s43 = sadd.s32 %s42, 1
      %s44 = scalar_select %p41, %s42, %s43
      %p47 = pneg %p41
      %p48 = scmp.eq.s32.totalorder %s13, 1
      %p49 = por %p47, %p48
      %p50 = scmp.ne.s32.totalorder %s42, %s45
      %p51 = scmp.eq.s32.totalorder %s13, 0
      %p52 = por %p50, %p51
      %p53 = scmp.ne.s32.totalorder %s42, %s45
      %p54 = scmp.eq.s32.totalorder %s18, 1
      %p55 = por %p53, %p54
      %p56 = scmp.ne.s32.totalorder %s45, %s46
      %p57 = scmp.eq.s32.totalorder %s18, 0
      %p58 = por %p56, %p57
      %p59 = scmp.ne.s32.totalorder %s45, %s46
      %p60 = scmp.eq.s32.totalorder %s19, 1
      %p61 = por %p59, %p60
      %p63 = scmp.ne.s32.totalorder %s46, %s62
      %p64 = scmp.eq.s32.totalorder %s19, 0
      %p65 = por %p63, %p64
      %s66 = ssub.s32 %s22, %s31
      %p67 = scmp.eq.s32.totalorder %s66, 0
      %s69 = sadd.s32 %s68, 1
      %s70 = scalar_select %p67, %s68, %s69
      %p73 = pneg %p67
      %p74 = scmp.eq.s32.totalorder %s13, 1
      %p75 = por %p73, %p74
      %p76 = scmp.ne.s32.totalorder %s68, %s71
      %p77 = scmp.eq.s32.totalorder %s13, 0
      %p78 = por %p76, %p77
      %p79 = scmp.ne.s32.totalorder %s68, %s71
      %p80 = scmp.eq.s32.totalorder %s18, 1
      %p81 = por %p79, %p80
      %p82 = scmp.ne.s32.totalorder %s71, %s72
      %p83 = scmp.eq.s32.totalorder %s18, 0
      %p84 = por %p82, %p83
      %p85 = scmp.ne.s32.totalorder %s71, %s72
      %p86 = scmp.eq.s32.totalorder %s19, 1
      %p87 = por %p85, %p86
      %p89 = scmp.ne.s32.totalorder %s72, %s88
      %p90 = scmp.eq.s32.totalorder %s19, 0
      %p91 = por %p89, %p90
      %s92 = ssub.s32 %s22, %s31
      %p93 = scmp.eq.s32.totalorder %s92, 0
      %s95 = sadd.s32 %s94, 1
      %s96 = scalar_select %p93, %s94, %s95
      %p99 = pneg %p93
      %p100 = scmp.eq.s32.totalorder %s13, 1
      %p101 = por %p99, %p100
      %p102 = scmp.ne.s32.totalorder %s94, %s97
      %p103 = scmp.eq.s32.totalorder %s13, 0
      %p104 = por %p102, %p103
      %p105 = scmp.ne.s32.totalorder %s94, %s97
      %p106 = scmp.eq.s32.totalorder %s18, 1
      %p107 = por %p105, %p106
      %p108 = scmp.ne.s32.totalorder %s97, %s98
      %p109 = scmp.eq.s32.totalorder %s18, 0
      %p110 = por %p108, %p109
      %p111 = scmp.ne.s32.totalorder %s97, %s98
      %p112 = scmp.eq.s32.totalorder %s19, 1
      %p113 = por %p111, %p112
      %p115 = scmp.ne.s32.totalorder %s98, %s114
      %p116 = scmp.eq.s32.totalorder %s19, 0
      %p117 = por %p115, %p116
      %s118 = ssub.s32 %s22, %s31
      %p119 = scmp.eq.s32.totalorder %s118, 0
      %s121 = sadd.s32 %s120, 1
      %s122 = scalar_select %p119, %s120, %s121
      %p125 = pneg %p119
      %p126 = scmp.eq.s32.totalorder %s13, 1
      %p127 = por %p125, %p126
      %p128 = scmp.ne.s32.totalorder %s120, %s123
      %p129 = scmp.eq.s32.totalorder %s13, 0
      %p130 = por %p128, %p129
      %p131 = scmp.ne.s32.totalorder %s120, %s123
      %p132 = scmp.eq.s32.totalorder %s18, 1
      %p133 = por %p131, %p132
      %p134 = scmp.ne.s32.totalorder %s123, %s124
      %p135 = scmp.eq.s32.totalorder %s18, 0
      %p136 = por %p134, %p135
      %p137 = scmp.ne.s32.totalorder %s123, %s124
      %p138 = scmp.eq.s32.totalorder %s19, 1
      %p139 = por %p137, %p138
      %p141 = scmp.ne.s32.totalorder %s124, %s140
      %p142 = scmp.eq.s32.totalorder %s19, 0
      %p143 = por %p141, %p142
      %s144 = ssub.s32 %s20, %s39
      %s145 = ssub.s32 %s21, %s35
      %s146 = sor.u32 %s144, %s145
      %s147 = ssub.s32 %s22, %s31
      %s148 = sor.u32 %s146, %s147
      %p149 = scmp.eq.s32.totalorder %s148, 0
      %s151 = sadd.s32 %s150, 1
      %s152 = scalar_select %p149, %s150, %s151
      %p155 = pneg %p149
      %p156 = scmp.eq.s32.totalorder %s13, 1
      %p157 = por %p155, %p156
      %p158 = scmp.ne.s32.totalorder %s150, %s153
      %p159 = scmp.eq.s32.totalorder %s13, 0
      %p160 = por %p158, %p159
      %p161 = scmp.ne.s32.totalorder %s150, %s153
      %p162 = scmp.eq.s32.totalorder %s18, 1
      %p163 = por %p161, %p162
      %p164 = scmp.ne.s32.totalorder %s153, %s154
      %p165 = scmp.eq.s32.totalorder %s18, 0
      %p166 = por %p164, %p165
      %p167 = scmp.ne.s32.totalorder %s153, %s154
      %p168 = scmp.eq.s32.totalorder %s19, 1
      %p169 = por %p167, %p168
      %p171 = scmp.ne.s32.totalorder %s154, %s170
      %p172 = scmp.eq.s32.totalorder %s19, 0
      %p173 = por %p171, %p172
      %p174 = scmp.le.s32.totalorder 1, %s13
      %p175 = scmp.lt.s32.totalorder %s13, 3
      %p176 = pnand %p174, %p175
      %p177 = pneg %p176
      // Predicated region
      $region9: #{tpu_custom_call.1} parent=5 // pred_check
        _
      $region10: #{tpu_custom_call.1} parent=5 // pred_check_branch
        %179 = sbr.rel (%p176) target = $region12
      $region11: #{tpu_custom_call.1} parent=5 // pred_region
        %s180 = ssub.s32 %s13, 1
        // Predicated region
        $region13: #{tpu_custom_call.1} parent=11 // pred_check
          %p181 = pneg %p84
        $region14: #{tpu_custom_call.1} parent=11 // pred_check_branch
          %183 = sbr.rel (%p181) target = $region16
        $region15: #{tpu_custom_call.1} parent=11 // pred_region
          %p184 = scmp.lt.s32.totalorder %s25, 0
          %s185 = scalar_select %p184, %s25, 0
          %s186 = smul.addr %s185, 2
          %s187 = scalar_lea.vmem %s1, %s186
        $region16: #{tpu_custom_call.1} parent=11 // pred_fallthru
          _
        // Predicated region
        $region17: #{tpu_custom_call.1} parent=11 // pred_check
          %p188 = pneg %p110
        $region18: #{tpu_custom_call.1} parent=11 // pred_check_branch
          %190 = sbr.rel (%p188) target = $region20
        $region19: #{tpu_custom_call.1} parent=11 // pred_region
          %p191 = scmp.lt.s32.totalorder %s25, 0
          %s192 = scalar_select %p191, %s25, 0
          %s193 = scalar_lea.vmem %s2, %s192
        $region20: #{tpu_custom_call.1} parent=11 // pred_fallthru
          _
        // Predicated region
        $region21: #{tpu_custom_call.1} parent=11 // pred_check
          %p194 = pneg %p136
        $region22: #{tpu_custom_call.1} parent=11 // pred_check_branch
          %196 = sbr.rel (%p194) target = $region24
        $region23: #{tpu_custom_call.1} parent=11 // pred_region
          %p197 = scmp.lt.s32.totalorder %s25, 0
          %s198 = scalar_select %p197, %s25, 0
          %s199 = scalar_lea.vmem %s3, %s198
        $region24: #{tpu_custom_call.1} parent=11 // pred_fallthru
          _
      $region12: #{tpu_custom_call.1} parent=5 // pred_fallthru
        _
      %p200 = scmp.lt.s32.totalorder %s13, 2
      // Predicated region
      $region25: #{tpu_custom_call.1} parent=5 // pred_check
        %p201 = pneg %p200
      $region26: #{tpu_custom_call.1} parent=5 // pred_check_branch
        %203 = sbr.rel (%p201) target = $region28
      $region27: #{tpu_custom_call.1} parent=5 // pred_region
        // Predicated region
        $region29: #{tpu_custom_call.1} parent=27 // pred_check
          %p204 = pneg %p52
        $region30: #{tpu_custom_call.1} parent=27 // pred_check_branch
          %206 = sbr.rel (%p204) target = $region32
        $region31: #{tpu_custom_call.1} parent=27 // pred_region
          %p207 = scmp.lt.s32.totalorder %s20, 1
          %s208 = scalar_select %p207, %s20, 1
          %s209 = smul.addr %s208, 72
          %s210 = smul.addr %s209, 4
          %s211 = scalar_lea.vmem %s0, %s210
        $region32: #{tpu_custom_call.1} parent=27 // pred_fallthru
          _
      $region28: #{tpu_custom_call.1} parent=5 // pred_fallthru
        _
      %p212 = scmp.le.s32.totalorder 1, %s13
      %p213 = scmp.lt.s32.totalorder %s13, 3
      %p214 = pnand %p212, %p213
      %p215 = pneg %p214
      // Predicated region
      $region33: #{tpu_custom_call.1} parent=5 // pred_check
        _
      $region34: #{tpu_custom_call.1} parent=5 // pred_check_branch
        %217 = sbr.rel (%p214) target = $region36
      $region35: #{tpu_custom_call.1} parent=5 // pred_region
        %s218 = ssub.s32 %s13, 1
        %p219 = scmp.lt.s32.totalorder %s23, 1
        %s220 = scalar_select %p219, %s23, 1
        %s221 = smul.addr %s220, 72
        %s222 = smul.addr %s221, 4
        %s223 = scalar_lea.vmem %s0, %s222
        %p224 = pneg %p58
        %p225 = pneg %p55
        %p226 = scmp.lt.s32.totalorder %s25, 0
        %s227 = scalar_select %p226, %s25, 0
        %s228 = smul.addr %s227, 2
        %s229 = scalar_lea.vmem %s1, %s228
        %p230 = pneg %p84
        %p231 = pneg %p81
        %p232 = scmp.lt.s32.totalorder %s25, 0
        %s233 = scalar_select %p232, %s25, 0
        %s234 = scalar_lea.vmem %s2, %s233
        %p235 = pneg %p110
        %p236 = pneg %p107
        %p237 = scmp.lt.s32.totalorder %s25, 0
        %s238 = scalar_select %p237, %s25, 0
        %s239 = scalar_lea.vmem %s3, %s238
        %p240 = pneg %p136
        %p241 = pneg %p133
        %p242 = pneg %p166
        %p243 = pneg %p163
        %s244 = sand.u32 %s153, 1
        %s245 = scalar_lea.sflag [#allocation3], %s244
        %s246 = sand.u32 %s153, 1
        %s247 = smul.addr %s246, 64
        %s248 = scalar_lea.vmem [#allocation2], %s247
        %p249 = scmp.lt.s32.totalorder %s23, 1
        %s250 = scalar_select %p249, %s23, 1
        %s251 = smul.addr %s250, 72
        %s252 = smul.addr %s251, 4
        %s253 = scalar_lea.vmem %s0, %s252
        %p254 = scmp.lt.s32.totalorder %s25, 0
        %s255 = scalar_select %p254, %s25, 0
        %s256 = smul.addr %s255, 2
        %s257 = scalar_lea.vmem %s1, %s256
        %p258 = scmp.lt.s32.totalorder %s25, 0
        %s259 = scalar_select %p258, %s25, 0
        %s260 = scalar_lea.vmem %s2, %s259
        %p261 = scmp.lt.s32.totalorder %s25, 0
        %s262 = scalar_select %p261, %s25, 0
        %s263 = scalar_lea.vmem %s3, %s262
        %s264 = smul.u32 8, %s24
        %s266 = smul.u32 %s24, 8
        %s267 = smul.u32 %s266, 2
        %s268 = smul.addr %s267, 4
        %s269 = scalar_lea.vmem %s253, %s268
        %v270 = vld [vmem:[%s269] sm:$0xf]
        %v271 = vld [vmem:[%s269 + $0x8] sm:$0xf]
        %v272 = vld [vmem:[%s269 + $0x10] sm:$0xf]
        %v273 = vld [vmem:[%s269 + $0x18] sm:$0xf]
        %v274 = vld [vmem:[%s269 + $0x20] sm:$0xf]
        %v275 = vld [vmem:[%s269 + $0x28] sm:$0xf]
        %v276 = vld [vmem:[%s269 + $0x30] sm:$0xf]
        %v277 = vld [vmem:[%s269 + $0x38] sm:$0xf]
        %v278 = vld [vmem:[%s257] sm:$0x3]
        %s279 = sadd.s32 %s267, 18
        %s280 = smul.addr %s279, 4
        %s281 = scalar_lea.vmem %s253, %s280
        %v282 = vld [vmem:[%s281] sm:$0xf]
        %v283 = vld [vmem:[%s281 + $0x8] sm:$0xf]
        %v284 = vld [vmem:[%s281 + $0x10] sm:$0xf]
        %v285 = vld [vmem:[%s281 + $0x18] sm:$0xf]
        %v286 = vld [vmem:[%s281 + $0x20] sm:$0xf]
        %v287 = vld [vmem:[%s281 + $0x28] sm:$0xf]
        %v288 = vld [vmem:[%s281 + $0x30] sm:$0xf]
        %v289 = vld [vmem:[%s281 + $0x38] sm:$0xf]
        %s290 = scalar_lea.vmem %s257, 2
        %v291 = vld [vmem:[%s290] sm:$0x3]
        %v300 = vunpack.c.l.b16 %v282
        %v301 = vunpack.c.l.b16 %v283
        %v302 = vunpack.c.l.b16 %v284
        %v303 = vunpack.c.l.b16 %v285
        %v304 = vunpack.c.l.b16 %v286
        %v305 = vunpack.c.l.b16 %v287
        %v306 = vunpack.c.l.b16 %v288
        %v307 = vunpack.c.l.b16 %v289
        %v308 = vpack.c.b16 %v301, %v300
        %v309 = vpack.c.b16 %v303, %v302
        %v310 = vpack.c.b16 %v305, %v304
        %v311 = vpack.c.b16 %v307, %v306
        %vm312 = vcmask 31744
        %v314 = vsel %vm312, %v308, 0
        %v317 = vsel %vm312, %v309, 0
        %v320 = vsel %vm312, %v310, 0
        %v323 = vsel %vm312, %v311, 0
        %vm325 = vcmask 1041408
        %v327 = vsel %vm325, %v291, 0
        %329 = vmatprep.subr.bf16.mxu0 0
        %330 = vmatpush1.bf16.msra.mxu0 0
        %331 = vmatprep.subr.bf16.mxu0 0
        %332 = vmatpush1.bf16.msra.mxu0 0
        %333 = vmatprep.subr.bf16.mxu0 0
        %334 = vmatpush1.bf16.msra.mxu0 0
        %335 = vmatprep.subr.bf16.mxu0 0
        %336 = vmatpush1.bf16.msra.mxu0 0
        %337 = vmatprep.subr.bf16.mxu0 0
        %338 = vmatpush1.bf16.msra.mxu0 0
        %339 = vmatprep.subr.bf16.mxu0 0
        %340 = vmatpush1.bf16.msra.mxu0 0
        %341 = vmatprep.subr.bf16.mxu0 0
        %342 = vmatpush1.bf16.msra.mxu0 0
        %343 = vmatprep.subr.bf16.mxu0 0
        %344 = vmatpush1.bf16.msra.mxu0 %v327
        %345 = vmatprep.subr.bf16.mxu0 0
        %346 = vmatpush2.bf16.msra.mxu0 0
        %347 = vmatprep.subr.bf16.mxu0 0
        %348 = vmatpush2.bf16.msra.mxu0 0
        %349 = vmatprep.subr.bf16.mxu0 0
        %350 = vmatpush2.bf16.msra.mxu0 0
        %351 = vmatprep.subr.bf16.mxu0 0
        %352 = vmatpush2.bf16.msra.mxu0 0
        %353 = vmatprep.subr.bf16.mxu0 0
        %354 = vmatpush2.bf16.msra.mxu0 0
        %355 = vmatprep.subr.bf16.mxu0 0
        %356 = vmatpush2.bf16.msra.mxu0 0
        %357 = vmatprep.subr.bf16.mxu0 0
        %358 = vmatpush2.bf16.msra.mxu0 0
        %359 = vmatprep.subr.bf16.mxu0 0
        %360 = vmatpush2.bf16.msra.mxu0 0
        %361 = vmatprep.mubr.bf16.mxu0 0
        %362 = vmatmul.mubr.bf16.gmra.mxu0 %v314
        %v363 = vpop.f32.mrf.mxu0
        %v364 = vadd.f32 0.0, %v363
        %v365 = vpop.f32.mrf.mxu0
        %v366 = vpop.f32.mrf.mxu0
        %v367 = vadd.f32 0.0, %v366
        %v368 = vpop.f32.mrf.mxu0
        %369 = vmatprep.mubr.bf16.mxu0 0
        %370 = vmatmul.mubr.bf16.gmra.mxu0 %v317
        %v371 = vpop.f32.mrf.mxu0
        %v372 = vadd.f32 0.0, %v371
        %v373 = vpop.f32.mrf.mxu0
        %v374 = vpop.f32.mrf.mxu0
        %v375 = vadd.f32 0.0, %v374
        %v376 = vpop.f32.mrf.mxu0
        %377 = vmatprep.mubr.bf16.mxu0 0
        %378 = vmatmul.mubr.bf16.gmra.mxu0 %v320
        %v379 = vpop.f32.mrf.mxu0
        %v380 = vadd.f32 0.0, %v379
        %v381 = vpop.f32.mrf.mxu0
        %v382 = vpop.f32.mrf.mxu0
        %v383 = vadd.f32 0.0, %v382
        %v384 = vpop.f32.mrf.mxu0
        %385 = vmatprep.mubr.bf16.mxu0 0
        %386 = vmatmul.mubr.bf16.gmra.mxu0 %v323
        %v387 = vpop.f32.mrf.mxu0
        %v388 = vadd.f32 0.0, %v387
        %v389 = vpop.f32.mrf.mxu0
        %v390 = vpop.f32.mrf.mxu0
        %v391 = vadd.f32 0.0, %v390
        %v392 = vpop.f32.mrf.mxu0
        %393 = vdwg.mxu0
        %v402 = vunpack.c.l.b16 %v270
        %v403 = vunpack.c.l.b16 %v271
        %v404 = vunpack.c.l.b16 %v272
        %v405 = vunpack.c.l.b16 %v273
        %v406 = vunpack.c.l.b16 %v274
        %v407 = vunpack.c.l.b16 %v275
        %v408 = vunpack.c.l.b16 %v276
        %v409 = vunpack.c.l.b16 %v277
        %v410 = vpack.c.b16 %v403, %v402
        %v411 = vpack.c.b16 %v405, %v404
        %v412 = vpack.c.b16 %v407, %v406
        %v413 = vpack.c.b16 %v409, %v408
        %v415 = vsel %vm312, %v410, 0
        %v418 = vsel %vm312, %v411, 0
        %v421 = vsel %vm312, %v412, 0
        %v424 = vsel %vm312, %v413, 0
        %v427 = vsel %vm325, %v278, 0
        %429 = vmatprep.subr.bf16.mxu0 0
        %430 = vmatpush1.bf16.msra.mxu0 0
        %431 = vmatprep.subr.bf16.mxu0 0
        %432 = vmatpush1.bf16.msra.mxu0 0
        %433 = vmatprep.subr.bf16.mxu0 0
        %434 = vmatpush1.bf16.msra.mxu0 0
        %435 = vmatprep.subr.bf16.mxu0 0
        %436 = vmatpush1.bf16.msra.mxu0 0
        %437 = vmatprep.subr.bf16.mxu0 0
        %438 = vmatpush1.bf16.msra.mxu0 0
        %439 = vmatprep.subr.bf16.mxu0 0
        %440 = vmatpush1.bf16.msra.mxu0 0
        %441 = vmatprep.subr.bf16.mxu0 0
        %442 = vmatpush1.bf16.msra.mxu0 0
        %443 = vmatprep.subr.bf16.mxu0 0
        %444 = vmatpush1.bf16.msra.mxu0 %v427
        %445 = vmatprep.subr.bf16.mxu0 0
        %446 = vmatpush2.bf16.msra.mxu0 0
        %447 = vmatprep.subr.bf16.mxu0 0
        %448 = vmatpush2.bf16.msra.mxu0 0
        %449 = vmatprep.subr.bf16.mxu0 0
        %450 = vmatpush2.bf16.msra.mxu0 0
        %451 = vmatprep.subr.bf16.mxu0 0
        %452 = vmatpush2.bf16.msra.mxu0 0
        %453 = vmatprep.subr.bf16.mxu0 0
        %454 = vmatpush2.bf16.msra.mxu0 0
        %455 = vmatprep.subr.bf16.mxu0 0
        %456 = vmatpush2.bf16.msra.mxu0 0
        %457 = vmatprep.subr.bf16.mxu0 0
        %458 = vmatpush2.bf16.msra.mxu0 0
        %459 = vmatprep.subr.bf16.mxu0 0
        %460 = vmatpush2.bf16.msra.mxu0 0
        %461 = vmatprep.mubr.bf16.mxu0 0
        %462 = vmatmul.mubr.bf16.gmra.mxu0 %v415
        %v463 = vpop.f32.mrf.mxu0
        %v464 = vadd.f32 %v364, %v463
        %v465 = vpop.f32.mrf.mxu0
        %v466 = vpop.f32.mrf.mxu0
        %v467 = vadd.f32 %v367, %v466
        %v468 = vpop.f32.mrf.mxu0
        %469 = vmatprep.mubr.bf16.mxu0 0
        %470 = vmatmul.mubr.bf16.gmra.mxu0 %v418
        %v471 = vpop.f32.mrf.mxu0
        %v472 = vadd.f32 %v372, %v471
        %v473 = vpop.f32.mrf.mxu0
        %v474 = vpop.f32.mrf.mxu0
        %v475 = vadd.f32 %v375, %v474
        %v476 = vpop.f32.mrf.mxu0
        %477 = vmatprep.mubr.bf16.mxu0 0
        %478 = vmatmul.mubr.bf16.gmra.mxu0 %v421
        %v479 = vpop.f32.mrf.mxu0
        %v480 = vadd.f32 %v380, %v479
        %v481 = vpop.f32.mrf.mxu0
        %v482 = vpop.f32.mrf.mxu0
        %v483 = vadd.f32 %v383, %v482
        %v484 = vpop.f32.mrf.mxu0
        %485 = vmatprep.mubr.bf16.mxu0 0
        %486 = vmatmul.mubr.bf16.gmra.mxu0 %v424
        %v487 = vpop.f32.mrf.mxu0
        %v488 = vadd.f32 %v388, %v487
        %v489 = vpop.f32.mrf.mxu0
        %v490 = vpop.f32.mrf.mxu0
        %v491 = vadd.f32 %v391, %v490
        %v492 = vpop.f32.mrf.mxu0
        %493 = vdwg.mxu0
        %v494 = vld [vmem:[%s269] sm:$0xf]
        %v495 = vld [vmem:[%s269 + $0x4] sm:$0x1]
        %v496 = vld [vmem:[%s269 + $0x8] sm:$0xf]
        %v497 = vld [vmem:[%s269 + $0xc] sm:$0x1]
        %v498 = vld [vmem:[%s269 + $0x10] sm:$0xf]
        %v499 = vld [vmem:[%s269 + $0x14] sm:$0x1]
        %v500 = vld [vmem:[%s269 + $0x18] sm:$0xf]
        %v501 = vld [vmem:[%s269 + $0x1c] sm:$0x1]
        %v502 = vld [vmem:[%s269 + $0x20] sm:$0xf]
        %v503 = vld [vmem:[%s269 + $0x24] sm:$0x1]
        %v504 = vld [vmem:[%s269 + $0x28] sm:$0xf]
        %v505 = vld [vmem:[%s269 + $0x2c] sm:$0x1]
        %v506 = vld [vmem:[%s269 + $0x30] sm:$0xf]
        %v507 = vld [vmem:[%s269 + $0x34] sm:$0x1]
        %v508 = vld [vmem:[%s269 + $0x38] sm:$0xf]
        %v509 = vld [vmem:[%s269 + $0x3c] sm:$0x1]
        %vm510 = vsmask.f32 3328
        %vm511 = vsmask.f32 7440
        %vm512 = vmor %vm510, %vm511
        %v514 = vshrl.u32 %v494, 16
        %v516 = vrot.slane %v514, 4
        %v517 = vshll.u32 %v494, 16
        %v519 = vrot.slane %v517, 5
        %v520 = vor.u32 %v516, %v519
        %v521 = vrot.slane %v520, 4
        %v523 = vshll.u32 %v495, 16
        %v525 = vrot.slane %v523, 5
        %v526 = vsel %vm512, %v521, %v525
        %v528 = vshrl.u32 %v496, 16
        %v530 = vrot.slane %v528, 4
        %v531 = vshll.u32 %v496, 16
        %v533 = vrot.slane %v531, 5
        %v534 = vor.u32 %v530, %v533
        %v535 = vrot.slane %v534, 4
        %v537 = vshll.u32 %v497, 16
        %v539 = vrot.slane %v537, 5
        %v540 = vsel %vm512, %v535, %v539
        %v542 = vshrl.u32 %v498, 16
        %v544 = vrot.slane %v542, 4
        %v545 = vshll.u32 %v498, 16
        %v547 = vrot.slane %v545, 5
        %v548 = vor.u32 %v544, %v547
        %v549 = vrot.slane %v548, 4
        %v551 = vshll.u32 %v499, 16
        %v553 = vrot.slane %v551, 5
        %v554 = vsel %vm512, %v549, %v553
        %v556 = vshrl.u32 %v500, 16
        %v558 = vrot.slane %v556, 4
        %v559 = vshll.u32 %v500, 16
        %v561 = vrot.slane %v559, 5
        %v562 = vor.u32 %v558, %v561
        %v563 = vrot.slane %v562, 4
        %v565 = vshll.u32 %v501, 16
        %v567 = vrot.slane %v565, 5
        %v568 = vsel %vm512, %v563, %v567
        %v570 = vshrl.u32 %v502, 16
        %v572 = vrot.slane %v570, 4
        %v573 = vshll.u32 %v502, 16
        %v575 = vrot.slane %v573, 5
        %v576 = vor.u32 %v572, %v575
        %v577 = vrot.slane %v576, 4
        %v579 = vshll.u32 %v503, 16
        %v581 = vrot.slane %v579, 5
        %v582 = vsel %vm512, %v577, %v581
        %v584 = vshrl.u32 %v504, 16
        %v586 = vrot.slane %v584, 4
        %v587 = vshll.u32 %v504, 16
        %v589 = vrot.slane %v587, 5
        %v590 = vor.u32 %v586, %v589
        %v591 = vrot.slane %v590, 4
        %v593 = vshll.u32 %v505, 16
        %v595 = vrot.slane %v593, 5
        %v596 = vsel %vm512, %v591, %v595
        %v598 = vshrl.u32 %v506, 16
        %v600 = vrot.slane %v598, 4
        %v601 = vshll.u32 %v506, 16
        %v603 = vrot.slane %v601, 5
        %v604 = vor.u32 %v600, %v603
        %v605 = vrot.slane %v604, 4
        %v607 = vshll.u32 %v507, 16
        %v609 = vrot.slane %v607, 5
        %v610 = vsel %vm512, %v605, %v609
        %v612 = vshrl.u32 %v508, 16
        %v614 = vrot.slane %v612, 4
        %v615 = vshll.u32 %v508, 16
        %v617 = vrot.slane %v615, 5
        %v618 = vor.u32 %v614, %v617
        %v619 = vrot.slane %v618, 4
        %v621 = vshll.u32 %v509, 16
        %v623 = vrot.slane %v621, 5
        %v624 = vsel %vm512, %v619, %v623
        %s625 = scalar_lea.vmem %s257, 4
        %v626 = vld [vmem:[%s625] sm:$0x3]
        %v627 = vunpack.c.l.b16 %v526
        %v628 = vunpack.c.l.b16 %v540
        %v629 = vunpack.c.l.b16 %v554
        %v630 = vunpack.c.l.b16 %v568
        %v631 = vunpack.c.l.b16 %v582
        %v632 = vunpack.c.l.b16 %v596
        %v633 = vunpack.c.l.b16 %v610
        %v634 = vunpack.c.l.b16 %v624
        %v635 = vpack.c.b16 %v628, %v627
        %v636 = vpack.c.b16 %v630, %v629
        %v637 = vpack.c.b16 %v632, %v631
        %v638 = vpack.c.b16 %v634, %v633
        %v640 = vsel %vm312, %v635, 0
        %v643 = vsel %vm312, %v636, 0
        %v646 = vsel %vm312, %v637, 0
        %v649 = vsel %vm312, %v638, 0
        %v652 = vsel %vm325, %v626, 0
        %654 = vmatprep.subr.bf16.mxu0 0
        %655 = vmatpush1.bf16.msra.mxu0 0
        %656 = vmatprep.subr.bf16.mxu0 0
        %657 = vmatpush1.bf16.msra.mxu0 0
        %658 = vmatprep.subr.bf16.mxu0 0
        %659 = vmatpush1.bf16.msra.mxu0 0
        %660 = vmatprep.subr.bf16.mxu0 0
        %661 = vmatpush1.bf16.msra.mxu0 0
        %662 = vmatprep.subr.bf16.mxu0 0
        %663 = vmatpush1.bf16.msra.mxu0 0
        %664 = vmatprep.subr.bf16.mxu0 0
        %665 = vmatpush1.bf16.msra.mxu0 0
        %666 = vmatprep.subr.bf16.mxu0 0
        %667 = vmatpush1.bf16.msra.mxu0 0
        %668 = vmatprep.subr.bf16.mxu0 0
        %669 = vmatpush1.bf16.msra.mxu0 %v652
        %670 = vmatprep.subr.bf16.mxu0 0
        %671 = vmatpush2.bf16.msra.mxu0 0
        %672 = vmatprep.subr.bf16.mxu0 0
        %673 = vmatpush2.bf16.msra.mxu0 0
        %674 = vmatprep.subr.bf16.mxu0 0
        %675 = vmatpush2.bf16.msra.mxu0 0
        %676 = vmatprep.subr.bf16.mxu0 0
        %677 = vmatpush2.bf16.msra.mxu0 0
        %678 = vmatprep.subr.bf16.mxu0 0
        %679 = vmatpush2.bf16.msra.mxu0 0
        %680 = vmatprep.subr.bf16.mxu0 0
        %681 = vmatpush2.bf16.msra.mxu0 0
        %682 = vmatprep.subr.bf16.mxu0 0
        %683 = vmatpush2.bf16.msra.mxu0 0
        %684 = vmatprep.subr.bf16.mxu0 0
        %685 = vmatpush2.bf16.msra.mxu0 0
        %686 = vmatprep.mubr.bf16.mxu0 0
        %687 = vmatmul.mubr.bf16.gmra.mxu0 %v640
        %v688 = vpop.f32.mrf.mxu0
        %v689 = vadd.f32 0.0, %v688
        %v690 = vpop.f32.mrf.mxu0
        %v691 = vpop.f32.mrf.mxu0
        %v692 = vadd.f32 0.0, %v691
        %v693 = vpop.f32.mrf.mxu0
        %694 = vmatprep.mubr.bf16.mxu0 0
        %695 = vmatmul.mubr.bf16.gmra.mxu0 %v643
        %v696 = vpop.f32.mrf.mxu0
        %v697 = vadd.f32 0.0, %v696
        %v698 = vpop.f32.mrf.mxu0
        %v699 = vpop.f32.mrf.mxu0
        %v700 = vadd.f32 0.0, %v699
        %v701 = vpop.f32.mrf.mxu0
        %702 = vmatprep.mubr.bf16.mxu0 0
        %703 = vmatmul.mubr.bf16.gmra.mxu0 %v646
        %v704 = vpop.f32.mrf.mxu0
        %v705 = vadd.f32 0.0, %v704
        %v706 = vpop.f32.mrf.mxu0
        %v707 = vpop.f32.mrf.mxu0
        %v708 = vadd.f32 0.0, %v707
        %v709 = vpop.f32.mrf.mxu0
        %710 = vmatprep.mubr.bf16.mxu0 0
        %711 = vmatmul.mubr.bf16.gmra.mxu0 %v649
        %v712 = vpop.f32.mrf.mxu0
        %v713 = vadd.f32 0.0, %v712
        %v714 = vpop.f32.mrf.mxu0
        %v715 = vpop.f32.mrf.mxu0
        %v716 = vadd.f32 0.0, %v715
        %v717 = vpop.f32.mrf.mxu0
        %718 = vdwg.mxu0
        %v719 = vadd.f32 %v464, %v689
        %v720 = vadd.f32 %v467, %v692
        %v721 = vadd.f32 %v472, %v697
        %v722 = vadd.f32 %v475, %v700
        %v723 = vadd.f32 %v480, %v705
        %v724 = vadd.f32 %v483, %v708
        %v725 = vadd.f32 %v488, %v713
        %v726 = vadd.f32 %v491, %v716
        %s727 = sadd.s32 %s267, 36
        %s728 = smul.addr %s727, 4
        %s729 = scalar_lea.vmem %s253, %s728
        %v730 = vld [vmem:[%s729] sm:$0xf]
        %v731 = vld [vmem:[%s729 + $0x8] sm:$0xf]
        %v732 = vld [vmem:[%s729 + $0x10] sm:$0xf]
        %v733 = vld [vmem:[%s729 + $0x18] sm:$0xf]
        %v734 = vld [vmem:[%s729 + $0x20] sm:$0xf]
        %v735 = vld [vmem:[%s729 + $0x28] sm:$0xf]
        %v736 = vld [vmem:[%s729 + $0x30] sm:$0xf]
        %v737 = vld [vmem:[%s729 + $0x38] sm:$0xf]
        %s738 = scalar_lea.vmem %s257, 6
        %v739 = vld [vmem:[%s738] sm:$0x3]
        %v748 = vunpack.c.l.b16 %v730
        %v749 = vunpack.c.l.b16 %v731
        %v750 = vunpack.c.l.b16 %v732
        %v751 = vunpack.c.l.b16 %v733
        %v752 = vunpack.c.l.b16 %v734
        %v753 = vunpack.c.l.b16 %v735
        %v754 = vunpack.c.l.b16 %v736
        %v755 = vunpack.c.l.b16 %v737
        %v756 = vpack.c.b16 %v749, %v748
        %v757 = vpack.c.b16 %v751, %v750
        %v758 = vpack.c.b16 %v753, %v752
        %v759 = vpack.c.b16 %v755, %v754
        %v761 = vsel %vm312, %v756, 0
        %v764 = vsel %vm312, %v757, 0
        %v767 = vsel %vm312, %v758, 0
        %v770 = vsel %vm312, %v759, 0
        %v773 = vsel %vm325, %v739, 0
        %775 = vmatprep.subr.bf16.mxu0 0
        %776 = vmatpush1.bf16.msra.mxu0 0
        %777 = vmatprep.subr.bf16.mxu0 0
        %778 = vmatpush1.bf16.msra.mxu0 0
        %779 = vmatprep.subr.bf16.mxu0 0
        %780 = vmatpush1.bf16.msra.mxu0 0
        %781 = vmatprep.subr.bf16.mxu0 0
        %782 = vmatpush1.bf16.msra.mxu0 0
        %783 = vmatprep.subr.bf16.mxu0 0
        %784 = vmatpush1.bf16.msra.mxu0 0
        %785 = vmatprep.subr.bf16.mxu0 0
        %786 = vmatpush1.bf16.msra.mxu0 0
        %787 = vmatprep.subr.bf16.mxu0 0
        %788 = vmatpush1.bf16.msra.mxu0 0
        %789 = vmatprep.subr.bf16.mxu0 0
        %790 = vmatpush1.bf16.msra.mxu0 %v773
        %791 = vmatprep.subr.bf16.mxu0 0
        %792 = vmatpush2.bf16.msra.mxu0 0
        %793 = vmatprep.subr.bf16.mxu0 0
        %794 = vmatpush2.bf16.msra.mxu0 0
        %795 = vmatprep.subr.bf16.mxu0 0
        %796 = vmatpush2.bf16.msra.mxu0 0
        %797 = vmatprep.subr.bf16.mxu0 0
        %798 = vmatpush2.bf16.msra.mxu0 0
        %799 = vmatprep.subr.bf16.mxu0 0
        %800 = vmatpush2.bf16.msra.mxu0 0
        %801 = vmatprep.subr.bf16.mxu0 0
        %802 = vmatpush2.bf16.msra.mxu0 0
        %803 = vmatprep.subr.bf16.mxu0 0
        %804 = vmatpush2.bf16.msra.mxu0 0
        %805 = vmatprep.subr.bf16.mxu0 0
        %806 = vmatpush2.bf16.msra.mxu0 0
        %807 = vmatprep.mubr.bf16.mxu0 0
        %808 = vmatmul.mubr.bf16.gmra.mxu0 %v761
        %v809 = vpop.f32.mrf.mxu0
        %v810 = vadd.f32 0.0, %v809
        %v811 = vpop.f32.mrf.mxu0
        %v812 = vpop.f32.mrf.mxu0
        %v813 = vadd.f32 0.0, %v812
        %v814 = vpop.f32.mrf.mxu0
        %815 = vmatprep.mubr.bf16.mxu0 0
        %816 = vmatmul.mubr.bf16.gmra.mxu0 %v764
        %v817 = vpop.f32.mrf.mxu0
        %v818 = vadd.f32 0.0, %v817
        %v819 = vpop.f32.mrf.mxu0
        %v820 = vpop.f32.mrf.mxu0
        %v821 = vadd.f32 0.0, %v820
        %v822 = vpop.f32.mrf.mxu0
        %823 = vmatprep.mubr.bf16.mxu0 0
        %824 = vmatmul.mubr.bf16.gmra.mxu0 %v767
        %v825 = vpop.f32.mrf.mxu0
        %v826 = vadd.f32 0.0, %v825
        %v827 = vpop.f32.mrf.mxu0
        %v828 = vpop.f32.mrf.mxu0
        %v829 = vadd.f32 0.0, %v828
        %v830 = vpop.f32.mrf.mxu0
        %831 = vmatprep.mubr.bf16.mxu0 0
        %832 = vmatmul.mubr.bf16.gmra.mxu0 %v770
        %v833 = vpop.f32.mrf.mxu0
        %v834 = vadd.f32 0.0, %v833
        %v835 = vpop.f32.mrf.mxu0
        %v836 = vpop.f32.mrf.mxu0
        %v837 = vadd.f32 0.0, %v836
        %v838 = vpop.f32.mrf.mxu0
        %839 = vdwg.mxu0
        %v840 = vadd.f32 %v719, %v810
        %v841 = vadd.f32 %v720, %v813
        %v842 = vadd.f32 %v721, %v818
        %v843 = vadd.f32 %v722, %v821
        %v844 = vadd.f32 %v723, %v826
        %v845 = vadd.f32 %v724, %v829
        %v846 = vadd.f32 %v725, %v834
        %v847 = vadd.f32 %v726, %v837
        %s848 = sadd.s32 %s267, 54
        %s849 = smul.addr %s848, 4
        %s850 = scalar_lea.vmem %s253, %s849
        %v851 = vld [vmem:[%s850] sm:$0xf]
        %v852 = vld [vmem:[%s850 + $0x8] sm:$0xf]
        %v853 = vld [vmem:[%s850 + $0x10] sm:$0xf]
        %v854 = vld [vmem:[%s850 + $0x18] sm:$0xf]
        %v855 = vld [vmem:[%s850 + $0x20] sm:$0xf]
        %v856 = vld [vmem:[%s850 + $0x28] sm:$0xf]
        %v857 = vld [vmem:[%s850 + $0x30] sm:$0xf]
        %v858 = vld [vmem:[%s850 + $0x38] sm:$0xf]
        %s859 = scalar_lea.vmem %s257, 8
        %v860 = vld [vmem:[%s859] sm:$0x3]
        %v869 = vunpack.c.l.b16 %v851
        %v870 = vunpack.c.l.b16 %v852
        %v871 = vunpack.c.l.b16 %v853
        %v872 = vunpack.c.l.b16 %v854
        %v873 = vunpack.c.l.b16 %v855
        %v874 = vunpack.c.l.b16 %v856
        %v875 = vunpack.c.l.b16 %v857
        %v876 = vunpack.c.l.b16 %v858
        %v877 = vpack.c.b16 %v870, %v869
        %v878 = vpack.c.b16 %v872, %v871
        %v879 = vpack.c.b16 %v874, %v873
        %v880 = vpack.c.b16 %v876, %v875
        %v882 = vsel %vm312, %v877, 0
        %v885 = vsel %vm312, %v878, 0
        %v888 = vsel %vm312, %v879, 0
        %v891 = vsel %vm312, %v880, 0
        %v894 = vsel %vm325, %v860, 0
        %896 = vmatprep.subr.bf16.mxu0 0
        %897 = vmatpush1.bf16.msra.mxu0 0
        %898 = vmatprep.subr.bf16.mxu0 0
        %899 = vmatpush1.bf16.msra.mxu0 0
        %900 = vmatprep.subr.bf16.mxu0 0
        %901 = vmatpush1.bf16.msra.mxu0 0
        %902 = vmatprep.subr.bf16.mxu0 0
        %903 = vmatpush1.bf16.msra.mxu0 0
        %904 = vmatprep.subr.bf16.mxu0 0
        %905 = vmatpush1.bf16.msra.mxu0 0
        %906 = vmatprep.subr.bf16.mxu0 0
        %907 = vmatpush1.bf16.msra.mxu0 0
        %908 = vmatprep.subr.bf16.mxu0 0
        %909 = vmatpush1.bf16.msra.mxu0 0
        %910 = vmatprep.subr.bf16.mxu0 0
        %911 = vmatpush1.bf16.msra.mxu0 %v894
        %912 = vmatprep.subr.bf16.mxu0 0
        %913 = vmatpush2.bf16.msra.mxu0 0
        %914 = vmatprep.subr.bf16.mxu0 0
        %915 = vmatpush2.bf16.msra.mxu0 0
        %916 = vmatprep.subr.bf16.mxu0 0
        %917 = vmatpush2.bf16.msra.mxu0 0
        %918 = vmatprep.subr.bf16.mxu0 0
        %919 = vmatpush2.bf16.msra.mxu0 0
        %920 = vmatprep.subr.bf16.mxu0 0
        %921 = vmatpush2.bf16.msra.mxu0 0
        %922 = vmatprep.subr.bf16.mxu0 0
        %923 = vmatpush2.bf16.msra.mxu0 0
        %924 = vmatprep.subr.bf16.mxu0 0
        %925 = vmatpush2.bf16.msra.mxu0 0
        %926 = vmatprep.subr.bf16.mxu0 0
        %927 = vmatpush2.bf16.msra.mxu0 0
        %928 = vmatprep.mubr.bf16.mxu0 0
        %929 = vmatmul.mubr.bf16.gmra.mxu0 %v882
        %v930 = vpop.f32.mrf.mxu0
        %v931 = vadd.f32 0.0, %v930
        %v932 = vpop.f32.mrf.mxu0
        %v933 = vpop.f32.mrf.mxu0
        %v934 = vadd.f32 0.0, %v933
        %v935 = vpop.f32.mrf.mxu0
        %936 = vmatprep.mubr.bf16.mxu0 0
        %937 = vmatmul.mubr.bf16.gmra.mxu0 %v885
        %v938 = vpop.f32.mrf.mxu0
        %v939 = vadd.f32 0.0, %v938
        %v940 = vpop.f32.mrf.mxu0
        %v941 = vpop.f32.mrf.mxu0
        %v942 = vadd.f32 0.0, %v941
        %v943 = vpop.f32.mrf.mxu0
        %944 = vmatprep.mubr.bf16.mxu0 0
        %945 = vmatmul.mubr.bf16.gmra.mxu0 %v888
        %v946 = vpop.f32.mrf.mxu0
        %v947 = vadd.f32 0.0, %v946
        %v948 = vpop.f32.mrf.mxu0
        %v949 = vpop.f32.mrf.mxu0
        %v950 = vadd.f32 0.0, %v949
        %v951 = vpop.f32.mrf.mxu0
        %952 = vmatprep.mubr.bf16.mxu0 0
        %953 = vmatmul.mubr.bf16.gmra.mxu0 %v891
        %v954 = vpop.f32.mrf.mxu0
        %v955 = vadd.f32 0.0, %v954
        %v956 = vpop.f32.mrf.mxu0
        %v957 = vpop.f32.mrf.mxu0
        %v958 = vadd.f32 0.0, %v957
        %v959 = vpop.f32.mrf.mxu0
        %960 = vdwg.mxu0
        %v961 = vadd.f32 %v840, %v931
        %v962 = vadd.f32 %v841, %v934
        %v963 = vadd.f32 %v842, %v939
        %v964 = vadd.f32 %v843, %v942
        %v965 = vadd.f32 %v844, %v947
        %v966 = vadd.f32 %v845, %v950
        %v967 = vadd.f32 %v846, %v955
        %v968 = vadd.f32 %v847, %v958
        %v969 = vld [vmem:[%s729] sm:$0xf]
        %v970 = vld [vmem:[%s729 + $0x4] sm:$0x1]
        %v971 = vld [vmem:[%s729 + $0x8] sm:$0xf]
        %v972 = vld [vmem:[%s729 + $0xc] sm:$0x1]
        %v973 = vld [vmem:[%s729 + $0x10] sm:$0xf]
        %v974 = vld [vmem:[%s729 + $0x14] sm:$0x1]
        %v975 = vld [vmem:[%s729 + $0x18] sm:$0xf]
        %v976 = vld [vmem:[%s729 + $0x1c] sm:$0x1]
        %v977 = vld [vmem:[%s729 + $0x20] sm:$0xf]
        %v978 = vld [vmem:[%s729 + $0x24] sm:$0x1]
        %v979 = vld [vmem:[%s729 + $0x28] sm:$0xf]
        %v980 = vld [vmem:[%s729 + $0x2c] sm:$0x1]
        %v981 = vld [vmem:[%s729 + $0x30] sm:$0xf]
        %v982 = vld [vmem:[%s729 + $0x34] sm:$0x1]
        %v983 = vld [vmem:[%s729 + $0x38] sm:$0xf]
        %v984 = vld [vmem:[%s729 + $0x3c] sm:$0x1]
        %v986 = vshrl.u32 %v969, 16
        %v988 = vrot.slane %v986, 4
        %v989 = vshll.u32 %v969, 16
        %v991 = vrot.slane %v989, 5
        %v992 = vor.u32 %v988, %v991
        %v993 = vrot.slane %v992, 4
        %v995 = vshll.u32 %v970, 16
        %v997 = vrot.slane %v995, 5
        %v998 = vsel %vm512, %v993, %v997
        %v1000 = vshrl.u32 %v971, 16
        %v1002 = vrot.slane %v1000, 4
        %v1003 = vshll.u32 %v971, 16
        %v1005 = vrot.slane %v1003, 5
        %v1006 = vor.u32 %v1002, %v1005
        %v1007 = vrot.slane %v1006, 4
        %v1009 = vshll.u32 %v972, 16
        %v1011 = vrot.slane %v1009, 5
        %v1012 = vsel %vm512, %v1007, %v1011
        %v1014 = vshrl.u32 %v973, 16
        %v1016 = vrot.slane %v1014, 4
        %v1017 = vshll.u32 %v973, 16
        %v1019 = vrot.slane %v1017, 5
        %v1020 = vor.u32 %v1016, %v1019
        %v1021 = vrot.slane %v1020, 4
        %v1023 = vshll.u32 %v974, 16
        %v1025 = vrot.slane %v1023, 5
        %v1026 = vsel %vm512, %v1021, %v1025
        %v1028 = vshrl.u32 %v975, 16
        %v1030 = vrot.slane %v1028, 4
        %v1031 = vshll.u32 %v975, 16
        %v1033 = vrot.slane %v1031, 5
        %v1034 = vor.u32 %v1030, %v1033
        %v1035 = vrot.slane %v1034, 4
        %v1037 = vshll.u32 %v976, 16
        %v1039 = vrot.slane %v1037, 5
        %v1040 = vsel %vm512, %v1035, %v1039
        %v1042 = vshrl.u32 %v977, 16
        %v1044 = vrot.slane %v1042, 4
        %v1045 = vshll.u32 %v977, 16
        %v1047 = vrot.slane %v1045, 5
        %v1048 = vor.u32 %v1044, %v1047
        %v1049 = vrot.slane %v1048, 4
        %v1051 = vshll.u32 %v978, 16
        %v1053 = vrot.slane %v1051, 5
        %v1054 = vsel %vm512, %v1049, %v1053
        %v1056 = vshrl.u32 %v979, 16
        %v1058 = vrot.slane %v1056, 4
        %v1059 = vshll.u32 %v979, 16
        %v1061 = vrot.slane %v1059, 5
        %v1062 = vor.u32 %v1058, %v1061
        %v1063 = vrot.slane %v1062, 4
        %v1065 = vshll.u32 %v980, 16
        %v1067 = vrot.slane %v1065, 5
        %v1068 = vsel %vm512, %v1063, %v1067
        %v1070 = vshrl.u32 %v981, 16
        %v1072 = vrot.slane %v1070, 4
        %v1073 = vshll.u32 %v981, 16
        %v1075 = vrot.slane %v1073, 5
        %v1076 = vor.u32 %v1072, %v1075
        %v1077 = vrot.slane %v1076, 4
        %v1079 = vshll.u32 %v982, 16
        %v1081 = vrot.slane %v1079, 5
        %v1082 = vsel %vm512, %v1077, %v1081
        %v1084 = vshrl.u32 %v983, 16
        %v1086 = vrot.slane %v1084, 4
        %v1087 = vshll.u32 %v983, 16
        %v1089 = vrot.slane %v1087, 5
        %v1090 = vor.u32 %v1086, %v1089
        %v1091 = vrot.slane %v1090, 4
        %v1093 = vshll.u32 %v984, 16
        %v1095 = vrot.slane %v1093, 5
        %v1096 = vsel %vm512, %v1091, %v1095
        %s1097 = scalar_lea.vmem %s257, 10
        %v1098 = vld [vmem:[%s1097] sm:$0x3]
        %v1099 = vunpack.c.l.b16 %v998
        %v1100 = vunpack.c.l.b16 %v1012
        %v1101 = vunpack.c.l.b16 %v1026
        %v1102 = vunpack.c.l.b16 %v1040
        %v1103 = vunpack.c.l.b16 %v1054
        %v1104 = vunpack.c.l.b16 %v1068
        %v1105 = vunpack.c.l.b16 %v1082
        %v1106 = vunpack.c.l.b16 %v1096
        %v1107 = vpack.c.b16 %v1100, %v1099
        %v1108 = vpack.c.b16 %v1102, %v1101
        %v1109 = vpack.c.b16 %v1104, %v1103
        %v1110 = vpack.c.b16 %v1106, %v1105
        %v1112 = vsel %vm312, %v1107, 0
        %v1115 = vsel %vm312, %v1108, 0
        %v1118 = vsel %vm312, %v1109, 0
        %v1121 = vsel %vm312, %v1110, 0
        %v1124 = vsel %vm325, %v1098, 0
        %1126 = vmatprep.subr.bf16.mxu0 0
        %1127 = vmatpush1.bf16.msra.mxu0 0
        %1128 = vmatprep.subr.bf16.mxu0 0
        %1129 = vmatpush1.bf16.msra.mxu0 0
        %1130 = vmatprep.subr.bf16.mxu0 0
        %1131 = vmatpush1.bf16.msra.mxu0 0
        %1132 = vmatprep.subr.bf16.mxu0 0
        %1133 = vmatpush1.bf16.msra.mxu0 0
        %1134 = vmatprep.subr.bf16.mxu0 0
        %1135 = vmatpush1.bf16.msra.mxu0 0
        %1136 = vmatprep.subr.bf16.mxu0 0
        %1137 = vmatpush1.bf16.msra.mxu0 0
        %1138 = vmatprep.subr.bf16.mxu0 0
        %1139 = vmatpush1.bf16.msra.mxu0 0
        %1140 = vmatprep.subr.bf16.mxu0 0
        %1141 = vmatpush1.bf16.msra.mxu0 %v1124
        %1142 = vmatprep.subr.bf16.mxu0 0
        %1143 = vmatpush2.bf16.msra.mxu0 0
        %1144 = vmatprep.subr.bf16.mxu0 0
        %1145 = vmatpush2.bf16.msra.mxu0 0
        %1146 = vmatprep.subr.bf16.mxu0 0
        %1147 = vmatpush2.bf16.msra.mxu0 0
        %1148 = vmatprep.subr.bf16.mxu0 0
        %1149 = vmatpush2.bf16.msra.mxu0 0
        %1150 = vmatprep.subr.bf16.mxu0 0
        %1151 = vmatpush2.bf16.msra.mxu0 0
        %1152 = vmatprep.subr.bf16.mxu0 0
        %1153 = vmatpush2.bf16.msra.mxu0 0
        %1154 = vmatprep.subr.bf16.mxu0 0
        %1155 = vmatpush2.bf16.msra.mxu0 0
        %1156 = vmatprep.subr.bf16.mxu0 0
        %1157 = vmatpush2.bf16.msra.mxu0 0
        %1158 = vmatprep.mubr.bf16.mxu0 0
        %1159 = vmatmul.mubr.bf16.gmra.mxu0 %v1112
        %v1160 = vpop.f32.mrf.mxu0
        %v1161 = vadd.f32 0.0, %v1160
        %v1162 = vpop.f32.mrf.mxu0
        %v1163 = vpop.f32.mrf.mxu0
        %v1164 = vadd.f32 0.0, %v1163
        %v1165 = vpop.f32.mrf.mxu0
        %1166 = vmatprep.mubr.bf16.mxu0 0
        %1167 = vmatmul.mubr.bf16.gmra.mxu0 %v1115
        %v1168 = vpop.f32.mrf.mxu0
        %v1169 = vadd.f32 0.0, %v1168
        %v1170 = vpop.f32.mrf.mxu0
        %v1171 = vpop.f32.mrf.mxu0
        %v1172 = vadd.f32 0.0, %v1171
        %v1173 = vpop.f32.mrf.mxu0
        %1174 = vmatprep.mubr.bf16.mxu0 0
        %1175 = vmatmul.mubr.bf16.gmra.mxu0 %v1118
        %v1176 = vpop.f32.mrf.mxu0
        %v1177 = vadd.f32 0.0, %v1176
        %v1178 = vpop.f32.mrf.mxu0
        %v1179 = vpop.f32.mrf.mxu0
        %v1180 = vadd.f32 0.0, %v1179
        %v1181 = vpop.f32.mrf.mxu0
        %1182 = vmatprep.mubr.bf16.mxu0 0
        %1183 = vmatmul.mubr.bf16.gmra.mxu0 %v1121
        %v1184 = vpop.f32.mrf.mxu0
        %v1185 = vadd.f32 0.0, %v1184
        %v1186 = vpop.f32.mrf.mxu0
        %v1187 = vpop.f32.mrf.mxu0
        %v1188 = vadd.f32 0.0, %v1187
        %v1189 = vpop.f32.mrf.mxu0
        %1190 = vdwg.mxu0
        %v1191 = vadd.f32 %v961, %v1161
        %v1192 = vadd.f32 %v962, %v1164
        %v1193 = vadd.f32 %v963, %v1169
        %v1194 = vadd.f32 %v964, %v1172
        %v1195 = vadd.f32 %v965, %v1177
        %v1196 = vadd.f32 %v966, %v1180
        %v1197 = vadd.f32 %v967, %v1185
        %v1198 = vadd.f32 %v968, %v1188
        %s1199 = sadd.s32 %s266, 1
        %s1200 = smul.u32 %s1199, 2
        %s1201 = smul.addr %s1200, 4
        %s1202 = scalar_lea.vmem %s253, %s1201
        %v1203 = vld [vmem:[%s1202] sm:$0xf]
        %v1204 = vld [vmem:[%s1202 + $0x8] sm:$0xf]
        %v1205 = vld [vmem:[%s1202 + $0x10] sm:$0xf]
        %v1206 = vld [vmem:[%s1202 + $0x18] sm:$0xf]
        %v1207 = vld [vmem:[%s1202 + $0x20] sm:$0xf]
        %v1208 = vld [vmem:[%s1202 + $0x28] sm:$0xf]
        %v1209 = vld [vmem:[%s1202 + $0x30] sm:$0xf]
        %v1210 = vld [vmem:[%s1202 + $0x38] sm:$0xf]
        %s1211 = scalar_lea.vmem %s257, 12
        %v1212 = vld [vmem:[%s1211] sm:$0x3]
        %v1221 = vunpack.c.l.b16 %v1203
        %v1222 = vunpack.c.l.b16 %v1204
        %v1223 = vunpack.c.l.b16 %v1205
        %v1224 = vunpack.c.l.b16 %v1206
        %v1225 = vunpack.c.l.b16 %v1207
        %v1226 = vunpack.c.l.b16 %v1208
        %v1227 = vunpack.c.l.b16 %v1209
        %v1228 = vunpack.c.l.b16 %v1210
        %v1229 = vpack.c.b16 %v1222, %v1221
        %v1230 = vpack.c.b16 %v1224, %v1223
        %v1231 = vpack.c.b16 %v1226, %v1225
        %v1232 = vpack.c.b16 %v1228, %v1227
        %v1234 = vsel %vm312, %v1229, 0
        %v1237 = vsel %vm312, %v1230, 0
        %v1240 = vsel %vm312, %v1231, 0
        %v1243 = vsel %vm312, %v1232, 0
        %v1246 = vsel %vm325, %v1212, 0
        %1248 = vmatprep.subr.bf16.mxu0 0
        %1249 = vmatpush1.bf16.msra.mxu0 0
        %1250 = vmatprep.subr.bf16.mxu0 0
        %1251 = vmatpush1.bf16.msra.mxu0 0
        %1252 = vmatprep.subr.bf16.mxu0 0
        %1253 = vmatpush1.bf16.msra.mxu0 0
        %1254 = vmatprep.subr.bf16.mxu0 0
        %1255 = vmatpush1.bf16.msra.mxu0 0
        %1256 = vmatprep.subr.bf16.mxu0 0
        %1257 = vmatpush1.bf16.msra.mxu0 0
        %1258 = vmatprep.subr.bf16.mxu0 0
        %1259 = vmatpush1.bf16.msra.mxu0 0
        %1260 = vmatprep.subr.bf16.mxu0 0
        %1261 = vmatpush1.bf16.msra.mxu0 0
        %1262 = vmatprep.subr.bf16.mxu0 0
        %1263 = vmatpush1.bf16.msra.mxu0 %v1246
        %1264 = vmatprep.subr.bf16.mxu0 0
        %1265 = vmatpush2.bf16.msra.mxu0 0
        %1266 = vmatprep.subr.bf16.mxu0 0
        %1267 = vmatpush2.bf16.msra.mxu0 0
        %1268 = vmatprep.subr.bf16.mxu0 0
        %1269 = vmatpush2.bf16.msra.mxu0 0
        %1270 = vmatprep.subr.bf16.mxu0 0
        %1271 = vmatpush2.bf16.msra.mxu0 0
        %1272 = vmatprep.subr.bf16.mxu0 0
        %1273 = vmatpush2.bf16.msra.mxu0 0
        %1274 = vmatprep.subr.bf16.mxu0 0
        %1275 = vmatpush2.bf16.msra.mxu0 0
        %1276 = vmatprep.subr.bf16.mxu0 0
        %1277 = vmatpush2.bf16.msra.mxu0 0
        %1278 = vmatprep.subr.bf16.mxu0 0
        %1279 = vmatpush2.bf16.msra.mxu0 0
        %1280 = vmatprep.mubr.bf16.mxu0 0
        %1281 = vmatmul.mubr.bf16.gmra.mxu0 %v1234
        %v1282 = vpop.f32.mrf.mxu0
        %v1283 = vadd.f32 0.0, %v1282
        %v1284 = vpop.f32.mrf.mxu0
        %v1285 = vpop.f32.mrf.mxu0
        %v1286 = vadd.f32 0.0, %v1285
        %v1287 = vpop.f32.mrf.mxu0
        %1288 = vmatprep.mubr.bf16.mxu0 0
        %1289 = vmatmul.mubr.bf16.gmra.mxu0 %v1237
        %v1290 = vpop.f32.mrf.mxu0
        %v1291 = vadd.f32 0.0, %v1290
        %v1292 = vpop.f32.mrf.mxu0
        %v1293 = vpop.f32.mrf.mxu0
        %v1294 = vadd.f32 0.0, %v1293
        %v1295 = vpop.f32.mrf.mxu0
        %1296 = vmatprep.mubr.bf16.mxu0 0
        %1297 = vmatmul.mubr.bf16.gmra.mxu0 %v1240
        %v1298 = vpop.f32.mrf.mxu0
        %v1299 = vadd.f32 0.0, %v1298
        %v1300 = vpop.f32.mrf.mxu0
        %v1301 = vpop.f32.mrf.mxu0
        %v1302 = vadd.f32 0.0, %v1301
        %v1303 = vpop.f32.mrf.mxu0
        %1304 = vmatprep.mubr.bf16.mxu0 0
        %1305 = vmatmul.mubr.bf16.gmra.mxu0 %v1243
        %v1306 = vpop.f32.mrf.mxu0
        %v1307 = vadd.f32 0.0, %v1306
        %v1308 = vpop.f32.mrf.mxu0
        %v1309 = vpop.f32.mrf.mxu0
        %v1310 = vadd.f32 0.0, %v1309
        %v1311 = vpop.f32.mrf.mxu0
        %1312 = vdwg.mxu0
        %v1313 = vadd.f32 %v1191, %v1283
        %v1314 = vadd.f32 %v1192, %v1286
        %v1315 = vadd.f32 %v1193, %v1291
        %v1316 = vadd.f32 %v1194, %v1294
        %v1317 = vadd.f32 %v1195, %v1299
        %v1318 = vadd.f32 %v1196, %v1302
        %v1319 = vadd.f32 %v1197, %v1307
        %v1320 = vadd.f32 %v1198, %v1310
        %s1321 = sadd.s32 %s1200, 18
        %s1322 = smul.addr %s1321, 4
        %s1323 = scalar_lea.vmem %s253, %s1322
        %v1324 = vld [vmem:[%s1323] sm:$0xf]
        %v1325 = vld [vmem:[%s1323 + $0x8] sm:$0xf]
        %v1326 = vld [vmem:[%s1323 + $0x10] sm:$0xf]
        %v1327 = vld [vmem:[%s1323 + $0x18] sm:$0xf]
        %v1328 = vld [vmem:[%s1323 + $0x20] sm:$0xf]
        %v1329 = vld [vmem:[%s1323 + $0x28] sm:$0xf]
        %v1330 = vld [vmem:[%s1323 + $0x30] sm:$0xf]
        %v1331 = vld [vmem:[%s1323 + $0x38] sm:$0xf]
        %s1332 = scalar_lea.vmem %s257, 14
        %v1333 = vld [vmem:[%s1332] sm:$0x3]
        %v1342 = vunpack.c.l.b16 %v1324
        %v1343 = vunpack.c.l.b16 %v1325
        %v1344 = vunpack.c.l.b16 %v1326
        %v1345 = vunpack.c.l.b16 %v1327
        %v1346 = vunpack.c.l.b16 %v1328
        %v1347 = vunpack.c.l.b16 %v1329
        %v1348 = vunpack.c.l.b16 %v1330
        %v1349 = vunpack.c.l.b16 %v1331
        %v1350 = vpack.c.b16 %v1343, %v1342
        %v1351 = vpack.c.b16 %v1345, %v1344
        %v1352 = vpack.c.b16 %v1347, %v1346
        %v1353 = vpack.c.b16 %v1349, %v1348
        %v1355 = vsel %vm312, %v1350, 0
        %v1358 = vsel %vm312, %v1351, 0
        %v1361 = vsel %vm312, %v1352, 0
        %v1364 = vsel %vm312, %v1353, 0
        %v1367 = vsel %vm325, %v1333, 0
        %1369 = vmatprep.subr.bf16.mxu0 0
        %1370 = vmatpush1.bf16.msra.mxu0 0
        %1371 = vmatprep.subr.bf16.mxu0 0
        %1372 = vmatpush1.bf16.msra.mxu0 0
        %1373 = vmatprep.subr.bf16.mxu0 0
        %1374 = vmatpush1.bf16.msra.mxu0 0
        %1375 = vmatprep.subr.bf16.mxu0 0
        %1376 = vmatpush1.bf16.msra.mxu0 0
        %1377 = vmatprep.subr.bf16.mxu0 0
        %1378 = vmatpush1.bf16.msra.mxu0 0
        %1379 = vmatprep.subr.bf16.mxu0 0
        %1380 = vmatpush1.bf16.msra.mxu0 0
        %1381 = vmatprep.subr.bf16.mxu0 0
        %1382 = vmatpush1.bf16.msra.mxu0 0
        %1383 = vmatprep.subr.bf16.mxu0 0
        %1384 = vmatpush1.bf16.msra.mxu0 %v1367
        %1385 = vmatprep.subr.bf16.mxu0 0
        %1386 = vmatpush2.bf16.msra.mxu0 0
        %1387 = vmatprep.subr.bf16.mxu0 0
        %1388 = vmatpush2.bf16.msra.mxu0 0
        %1389 = vmatprep.subr.bf16.mxu0 0
        %1390 = vmatpush2.bf16.msra.mxu0 0
        %1391 = vmatprep.subr.bf16.mxu0 0
        %1392 = vmatpush2.bf16.msra.mxu0 0
        %1393 = vmatprep.subr.bf16.mxu0 0
        %1394 = vmatpush2.bf16.msra.mxu0 0
        %1395 = vmatprep.subr.bf16.mxu0 0
        %1396 = vmatpush2.bf16.msra.mxu0 0
        %1397 = vmatprep.subr.bf16.mxu0 0
        %1398 = vmatpush2.bf16.msra.mxu0 0
        %1399 = vmatprep.subr.bf16.mxu0 0
        %1400 = vmatpush2.bf16.msra.mxu0 0
        %1401 = vmatprep.mubr.bf16.mxu0 0
        %1402 = vmatmul.mubr.bf16.gmra.mxu0 %v1355
        %v1403 = vpop.f32.mrf.mxu0
        %v1404 = vadd.f32 0.0, %v1403
        %v1405 = vpop.f32.mrf.mxu0
        %v1406 = vpop.f32.mrf.mxu0
        %v1407 = vadd.f32 0.0, %v1406
        %v1408 = vpop.f32.mrf.mxu0
        %1409 = vmatprep.mubr.bf16.mxu0 0
        %1410 = vmatmul.mubr.bf16.gmra.mxu0 %v1358
        %v1411 = vpop.f32.mrf.mxu0
        %v1412 = vadd.f32 0.0, %v1411
        %v1413 = vpop.f32.mrf.mxu0
        %v1414 = vpop.f32.mrf.mxu0
        %v1415 = vadd.f32 0.0, %v1414
        %v1416 = vpop.f32.mrf.mxu0
        %1417 = vmatprep.mubr.bf16.mxu0 0
        %1418 = vmatmul.mubr.bf16.gmra.mxu0 %v1361
        %v1419 = vpop.f32.mrf.mxu0
        %v1420 = vadd.f32 0.0, %v1419
        %v1421 = vpop.f32.mrf.mxu0
        %v1422 = vpop.f32.mrf.mxu0
        %v1423 = vadd.f32 0.0, %v1422
        %v1424 = vpop.f32.mrf.mxu0
        %1425 = vmatprep.mubr.bf16.mxu0 0
        %1426 = vmatmul.mubr.bf16.gmra.mxu0 %v1364
        %v1427 = vpop.f32.mrf.mxu0
        %v1428 = vadd.f32 0.0, %v1427
        %v1429 = vpop.f32.mrf.mxu0
        %v1430 = vpop.f32.mrf.mxu0
        %v1431 = vadd.f32 0.0, %v1430
        %v1432 = vpop.f32.mrf.mxu0
        %1433 = vdwg.mxu0
        %v1434 = vadd.f32 %v1313, %v1404
        %v1435 = vadd.f32 %v1314, %v1407
        %v1436 = vadd.f32 %v1315, %v1412
        %v1437 = vadd.f32 %v1316, %v1415
        %v1438 = vadd.f32 %v1317, %v1420
        %v1439 = vadd.f32 %v1318, %v1423
        %v1440 = vadd.f32 %v1319, %v1428
        %v1441 = vadd.f32 %v1320, %v1431
        %v1442 = vld [vmem:[%s1202] sm:$0xf]
        %v1443 = vld [vmem:[%s1202 + $0x4] sm:$0x1]
        %v1444 = vld [vmem:[%s1202 + $0x8] sm:$0xf]
        %v1445 = vld [vmem:[%s1202 + $0xc] sm:$0x1]
        %v1446 = vld [vmem:[%s1202 + $0x10] sm:$0xf]
        %v1447 = vld [vmem:[%s1202 + $0x14] sm:$0x1]
        %v1448 = vld [vmem:[%s1202 + $0x18] sm:$0xf]
        %v1449 = vld [vmem:[%s1202 + $0x1c] sm:$0x1]
        %v1450 = vld [vmem:[%s1202 + $0x20] sm:$0xf]
        %v1451 = vld [vmem:[%s1202 + $0x24] sm:$0x1]
        %v1452 = vld [vmem:[%s1202 + $0x28] sm:$0xf]
        %v1453 = vld [vmem:[%s1202 + $0x2c] sm:$0x1]
        %v1454 = vld [vmem:[%s1202 + $0x30] sm:$0xf]
        %v1455 = vld [vmem:[%s1202 + $0x34] sm:$0x1]
        %v1456 = vld [vmem:[%s1202 + $0x38] sm:$0xf]
        %v1457 = vld [vmem:[%s1202 + $0x3c] sm:$0x1]
        %v1459 = vshrl.u32 %v1442, 16
        %v1461 = vrot.slane %v1459, 4
        %v1462 = vshll.u32 %v1442, 16
        %v1464 = vrot.slane %v1462, 5
        %v1465 = vor.u32 %v1461, %v1464
        %v1466 = vrot.slane %v1465, 4
        %v1468 = vshll.u32 %v1443, 16
        %v1470 = vrot.slane %v1468, 5
        %v1471 = vsel %vm512, %v1466, %v1470
        %v1473 = vshrl.u32 %v1444, 16
        %v1475 = vrot.slane %v1473, 4
        %v1476 = vshll.u32 %v1444, 16
        %v1478 = vrot.slane %v1476, 5
        %v1479 = vor.u32 %v1475, %v1478
        %v1480 = vrot.slane %v1479, 4
        %v1482 = vshll.u32 %v1445, 16
        %v1484 = vrot.slane %v1482, 5
        %v1485 = vsel %vm512, %v1480, %v1484
        %v1487 = vshrl.u32 %v1446, 16
        %v1489 = vrot.slane %v1487, 4
        %v1490 = vshll.u32 %v1446, 16
        %v1492 = vrot.slane %v1490, 5
        %v1493 = vor.u32 %v1489, %v1492
        %v1494 = vrot.slane %v1493, 4
        %v1496 = vshll.u32 %v1447, 16
        %v1498 = vrot.slane %v1496, 5
        %v1499 = vsel %vm512, %v1494, %v1498
        %v1501 = vshrl.u32 %v1448, 16
        %v1503 = vrot.slane %v1501, 4
        %v1504 = vshll.u32 %v1448, 16
        %v1506 = vrot.slane %v1504, 5
        %v1507 = vor.u32 %v1503, %v1506
        %v1508 = vrot.slane %v1507, 4
        %v1510 = vshll.u32 %v1449, 16
        %v1512 = vrot.slane %v1510, 5
        %v1513 = vsel %vm512, %v1508, %v1512
        %v1515 = vshrl.u32 %v1450, 16
        %v1517 = vrot.slane %v1515, 4
        %v1518 = vshll.u32 %v1450, 16
        %v1520 = vrot.slane %v1518, 5
        %v1521 = vor.u32 %v1517, %v1520
        %v1522 = vrot.slane %v1521, 4
        %v1524 = vshll.u32 %v1451, 16
        %v1526 = vrot.slane %v1524, 5
        %v1527 = vsel %vm512, %v1522, %v1526
        %v1529 = vshrl.u32 %v1452, 16
        %v1531 = vrot.slane %v1529, 4
        %v1532 = vshll.u32 %v1452, 16
        %v1534 = vrot.slane %v1532, 5
        %v1535 = vor.u32 %v1531, %v1534
        %v1536 = vrot.slane %v1535, 4
        %v1538 = vshll.u32 %v1453, 16
        %v1540 = vrot.slane %v1538, 5
        %v1541 = vsel %vm512, %v1536, %v1540
        %v1543 = vshrl.u32 %v1454, 16
        %v1545 = vrot.slane %v1543, 4
        %v1546 = vshll.u32 %v1454, 16
        %v1548 = vrot.slane %v1546, 5
        %v1549 = vor.u32 %v1545, %v1548
        %v1550 = vrot.slane %v1549, 4
        %v1552 = vshll.u32 %v1455, 16
        %v1554 = vrot.slane %v1552, 5
        %v1555 = vsel %vm512, %v1550, %v1554
        %v1557 = vshrl.u32 %v1456, 16
        %v1559 = vrot.slane %v1557, 4
        %v1560 = vshll.u32 %v1456, 16
        %v1562 = vrot.slane %v1560, 5
        %v1563 = vor.u32 %v1559, %v1562
        %v1564 = vrot.slane %v1563, 4
        %v1566 = vshll.u32 %v1457, 16
        %v1568 = vrot.slane %v1566, 5
        %v1569 = vsel %vm512, %v1564, %v1568
        %s1570 = scalar_lea.vmem %s257, 16
        %v1571 = vld [vmem:[%s1570] sm:$0x3]
        %v1572 = vunpack.c.l.b16 %v1471
        %v1573 = vunpack.c.l.b16 %v1485
        %v1574 = vunpack.c.l.b16 %v1499
        %v1575 = vunpack.c.l.b16 %v1513
        %v1576 = vunpack.c.l.b16 %v1527
        %v1577 = vunpack.c.l.b16 %v1541
        %v1578 = vunpack.c.l.b16 %v1555
        %v1579 = vunpack.c.l.b16 %v1569
        %v1580 = vpack.c.b16 %v1573, %v1572
        %v1581 = vpack.c.b16 %v1575, %v1574
        %v1582 = vpack.c.b16 %v1577, %v1576
        %v1583 = vpack.c.b16 %v1579, %v1578
        %v1585 = vsel %vm312, %v1580, 0
        %v1588 = vsel %vm312, %v1581, 0
        %v1591 = vsel %vm312, %v1582, 0
        %v1594 = vsel %vm312, %v1583, 0
        %v1597 = vsel %vm325, %v1571, 0
        %1599 = vmatprep.subr.bf16.mxu0 0
        %1600 = vmatpush1.bf16.msra.mxu0 0
        %1601 = vmatprep.subr.bf16.mxu0 0
        %1602 = vmatpush1.bf16.msra.mxu0 0
        %1603 = vmatprep.subr.bf16.mxu0 0
        %1604 = vmatpush1.bf16.msra.mxu0 0
        %1605 = vmatprep.subr.bf16.mxu0 0
        %1606 = vmatpush1.bf16.msra.mxu0 0
        %1607 = vmatprep.subr.bf16.mxu0 0
        %1608 = vmatpush1.bf16.msra.mxu0 0
        %1609 = vmatprep.subr.bf16.mxu0 0
        %1610 = vmatpush1.bf16.msra.mxu0 0
        %1611 = vmatprep.subr.bf16.mxu0 0
        %1612 = vmatpush1.bf16.msra.mxu0 0
        %1613 = vmatprep.subr.bf16.mxu0 0
        %1614 = vmatpush1.bf16.msra.mxu0 %v1597
        %1615 = vmatprep.subr.bf16.mxu0 0
        %1616 = vmatpush2.bf16.msra.mxu0 0
        %1617 = vmatprep.subr.bf16.mxu0 0
        %1618 = vmatpush2.bf16.msra.mxu0 0
        %1619 = vmatprep.subr.bf16.mxu0 0
        %1620 = vmatpush2.bf16.msra.mxu0 0
        %1621 = vmatprep.subr.bf16.mxu0 0
        %1622 = vmatpush2.bf16.msra.mxu0 0
        %1623 = vmatprep.subr.bf16.mxu0 0
        %1624 = vmatpush2.bf16.msra.mxu0 0
        %1625 = vmatprep.subr.bf16.mxu0 0
        %1626 = vmatpush2.bf16.msra.mxu0 0
        %1627 = vmatprep.subr.bf16.mxu0 0
        %1628 = vmatpush2.bf16.msra.mxu0 0
        %1629 = vmatprep.subr.bf16.mxu0 0
        %1630 = vmatpush2.bf16.msra.mxu0 0
        %1631 = vmatprep.mubr.bf16.mxu0 0
        %1632 = vmatmul.mubr.bf16.gmra.mxu0 %v1585
        %v1633 = vpop.f32.mrf.mxu0
        %v1634 = vadd.f32 0.0, %v1633
        %v1635 = vpop.f32.mrf.mxu0
        %v1636 = vpop.f32.mrf.mxu0
        %v1637 = vadd.f32 0.0, %v1636
        %v1638 = vpop.f32.mrf.mxu0
        %1639 = vmatprep.mubr.bf16.mxu0 0
        %1640 = vmatmul.mubr.bf16.gmra.mxu0 %v1588
        %v1641 = vpop.f32.mrf.mxu0
        %v1642 = vadd.f32 0.0, %v1641
        %v1643 = vpop.f32.mrf.mxu0
        %v1644 = vpop.f32.mrf.mxu0
        %v1645 = vadd.f32 0.0, %v1644
        %v1646 = vpop.f32.mrf.mxu0
        %1647 = vmatprep.mubr.bf16.mxu0 0
        %1648 = vmatmul.mubr.bf16.gmra.mxu0 %v1591
        %v1649 = vpop.f32.mrf.mxu0
        %v1650 = vadd.f32 0.0, %v1649
        %v1651 = vpop.f32.mrf.mxu0
        %v1652 = vpop.f32.mrf.mxu0
        %v1653 = vadd.f32 0.0, %v1652
        %v1654 = vpop.f32.mrf.mxu0
        %1655 = vmatprep.mubr.bf16.mxu0 0
        %1656 = vmatmul.mubr.bf16.gmra.mxu0 %v1594
        %v1657 = vpop.f32.mrf.mxu0
        %v1658 = vadd.f32 0.0, %v1657
        %v1659 = vpop.f32.mrf.mxu0
        %v1660 = vpop.f32.mrf.mxu0
        %v1661 = vadd.f32 0.0, %v1660
        %v1662 = vpop.f32.mrf.mxu0
        %1663 = vdwg.mxu0
        %v1664 = vadd.f32 %v1434, %v1634
        %v1665 = vadd.f32 %v1435, %v1637
        %v1666 = vadd.f32 %v1436, %v1642
        %v1667 = vadd.f32 %v1437, %v1645
        %v1668 = vadd.f32 %v1438, %v1650
        %v1669 = vadd.f32 %v1439, %v1653
        %v1670 = vadd.f32 %v1440, %v1658
        %v1671 = vadd.f32 %v1441, %v1661
        %v1672 = vld [vmem:[%s260] sm:$0x1]
        %v1674 = vlaneseq
        %v1675 = vshrl.u32 %v1674, 7
        %v1676 = vsub.s32 0, %v1675
        %v1677 = vrot.slane %v1672, %v1676
        %v1679 = vmul.f32 %v1664, %v1677
        %v1680 = vmul.f32 %v1665, %v1677
        %v1681 = vmul.f32 %v1666, %v1677
        %v1682 = vmul.f32 %v1667, %v1677
        %v1683 = vmul.f32 %v1668, %v1677
        %v1684 = vmul.f32 %v1669, %v1677
        %v1685 = vmul.f32 %v1670, %v1677
        %v1686 = vmul.f32 %v1671, %v1677
        %v1687 = vld [vmem:[%s263] sm:$0x1]
        %v1689 = vlaneseq
        %v1690 = vshrl.u32 %v1689, 7
        %v1691 = vsub.s32 0, %v1690
        %v1692 = vrot.slane %v1687, %v1691
        %v1694 = vadd.f32 %v1679, %v1692
        %v1695 = vadd.f32 %v1680, %v1692
        %v1696 = vadd.f32 %v1681, %v1692
        %v1697 = vadd.f32 %v1682, %v1692
        %v1698 = vadd.f32 %v1683, %v1692
        %v1699 = vadd.f32 %v1684, %v1692
        %v1700 = vadd.f32 %v1685, %v1692
        %v1701 = vadd.f32 %v1686, %v1692
        %v1702 = vmax.f32 %v1694, 0.0
        %v1703 = vmax.f32 %v1695, 0.0
        %v1704 = vmax.f32 %v1696, 0.0
        %v1705 = vmax.f32 %v1697, 0.0
        %v1706 = vmax.f32 %v1698, 0.0
        %v1707 = vmax.f32 %v1699, 0.0
        %v1708 = vmax.f32 %v1700, 0.0
        %v1709 = vmax.f32 %v1701, 0.0
        %vm1710 = vcmask 64512
        %1711 = vst.msk [vmem:[%s248] sm:$0xff] %vm1710, %v1702
        %1712 = vst.msk [vmem:[%s248 + $0x8] sm:$0xff] %vm1710, %v1703
        %1713 = vst.msk [vmem:[%s248 + $0x10] sm:$0xff] %vm1710, %v1704
        %1714 = vst.msk [vmem:[%s248 + $0x18] sm:$0xff] %vm1710, %v1705
        %1715 = vst.msk [vmem:[%s248 + $0x20] sm:$0xff] %vm1710, %v1706
        %1716 = vst.msk [vmem:[%s248 + $0x28] sm:$0xff] %vm1710, %v1707
        %1717 = vst.msk [vmem:[%s248 + $0x30] sm:$0xff] %vm1710, %v1708
        %1718 = vst.msk [vmem:[%s248 + $0x38] sm:$0xff] %vm1710, %v1709
        %s1719 = sand.u32 %s153, 1
        %s1720 = scalar_lea.sflag [#allocation3], %s1719
        %s1721 = sand.u32 %s153, 1
        %s1722 = smul.addr %s1721, 64
        %s1723 = scalar_lea.vmem [#allocation2], %s1722
        // Predicated region
        $region37: #{tpu_custom_call.1} parent=35 // pred_check
          %p1724 = pneg %p163
        $region38: #{tpu_custom_call.1} parent=35 // pred_check_branch
          %1726 = sbr.rel (%p1724) target = $region40
        $region39: #{tpu_custom_call.1} parent=35 // pred_region
          %s1727 = smul.u32 8, %s24
          %s1729 = ssub.s32 1024, 1024
          %1730 = vsyncadd %s1720, %s1729
          %s1731 = sadd.s32 %s25, %s1727
          %s1732 = smul.addr %s23, 8
          %s1733 = sadd.s32 %s1731, %s1732
          %s1734 = smul.addr %s1733, 128
          %s1735 = scalar_lea.hbm %s4, %s1734
          %s1736 = sshll.u32 %s1723, 4
          %s1737 = int_to_ptr.vmem [resolvable:$true] %s1736
          %1742 = dma.vmem_to_hbm [thread:$0]  %s1737, 1024, %s1735, %s1720, 128, 128, 8
        $region40: #{tpu_custom_call.1} parent=35 // pred_fallthru
          _
      $region36: #{tpu_custom_call.1} parent=5 // pred_fallthru
        _
      %p1743 = scmp.le.s32.totalorder 2, %s13
      // Predicated region
      $region41: #{tpu_custom_call.1} parent=5 // pred_check
        %p1744 = pneg %p1743
      $region42: #{tpu_custom_call.1} parent=5 // pred_check_branch
        %1746 = sbr.rel (%p1744) target = $region44
      $region43: #{tpu_custom_call.1} parent=5 // pred_region
        %s1747 = ssub.s32 %s13, 2
        // Predicated region
        $region45: #{tpu_custom_call.1} parent=43 // pred_check
          %p1748 = pneg %p169
        $region46: #{tpu_custom_call.1} parent=43 // pred_check_branch
          %1750 = sbr.rel (%p1748) target = $region48
        $region47: #{tpu_custom_call.1} parent=43 // pred_region
          %s1751 = sand.u32 %s154, 1
          %s1752 = scalar_lea.sflag [#allocation3], %s1751
          %s1753 = sand.u32 %s154, 1
          %s1754 = smul.addr %s1753, 64
          %s1755 = scalar_lea.vmem [#allocation2], %s1754
          %1756 = dma.done %s1752, 1024
        $region48: #{tpu_custom_call.1} parent=43 // pred_fallthru
          _
      $region44: #{tpu_custom_call.1} parent=5 // pred_fallthru
        _
    $region6: #{tpu_custom_call.1} parent=1 // loop_footer
      %s17 = sadd.s32 1, %s13
    $region7: #{tpu_custom_call.1} parent=1 // loop_footer_branch
      %12 = sbr.rel target = $region3
    $region8: #{tpu_custom_call.1} parent=1 // loop_exit
      _
    %1757 = vsyncpa [#allocation3], 1
    %s1758 = scalar_lea.sflag [#allocation3], 1
    %1759 = vsyncpa %s1758, 1

</llo_original>
